<compile_context>
chip_gen: v7x
topology: tpu7x:2x2x1
jax: 0.10.0
libtpu: 0.0.40
codegen_flags: <defaults>
</compile_context>

<pallas_src>
import jax
import jax.numpy as jnp
from jax.experimental import pallas as pl
from jax.experimental.pallas import tpu as pltpu


MAX_LENGTH = 50        # self.max_length
EMB_DIM = 50           # word2vec embedding dim (fc1 in_features = 50 * max_length)
HIDDEN = 64            # hidden_size
OUT_FEATURES = 2       # self.out_features

FEAT = MAX_LENGTH * EMB_DIM            # 2500 (left unpadded; full-dim block is legal)
HIDDEN_PAD = 128                       # pad 64 -> 128 (lane-dense)
OUT_PAD = 128                          # pad 2 -> 128 (unmasked stores)

MAX_TB = 512                           # batch tile rows (bf16 x tile = 2.5 MiB)


def _round_up(x, m):
    return (x + m - 1) // m * m


def _mlp_kernel(x_ref, w1_ref, b1_ref, w2_ref, b2_ref, out_ref):
    # x_ref : (TB, FEAT)            bf16  embedded+flattened activation tile
    # w1_ref: (FEAT, HIDDEN_PAD)    bf16  fc1 weight (VMEM resident)
    # b1_ref: (1, HIDDEN_PAD)       f32
    # w2_ref: (HIDDEN_PAD, OUT_PAD) f32   fc2 weight (VMEM resident)
    # b2_ref: (1, OUT_PAD)          f32
    # out_ref: (TB, OUT_PAD)        f32
    h = jnp.dot(x_ref[...], w1_ref[...], preferred_element_type=jnp.float32)
    h = jnp.maximum(h + b1_ref[...], 0.0)            # fc1 bias + ReLU
    # dropout: identity (eval mode)
    y = jnp.dot(h, w2_ref[...], preferred_element_type=jnp.float32) + b2_ref[...]
    out_ref[...] = y.astype(out_ref.dtype)


@jax.jit
def mlp_forward(x_ids, params):
    """x_ids: (B, MAX_LENGTH) int32 token ids -> (B, OUT_FEATURES) f32 logits."""
    word2vec = params["word2vec"]          # (vocab, EMB_DIM)
    w1 = params["w1"]                      # (FEAT, HIDDEN)   (stored transposed vs PyTorch)
    b1 = params["b1"]                      # (HIDDEN,)
    w2 = params["w2"]                      # (HIDDEN, OUT_FEATURES)
    b2 = params["b2"]                      # (OUT_FEATURES,)

    B = x_ids.shape[0]

    # --- glue: embedding lookup + flatten, gathered directly in bf16 ---
    # (jnp.take clamps out-of-range ids; nn.Embedding would error — behavioral only.)
    emb = jnp.take(word2vec.astype(jnp.bfloat16), x_ids, axis=0)   # (B, 50, 50) bf16
    x = emb.reshape(B, FEAT)                                       # (B, 2500) bf16, free view

    # --- weights: pad only the small (hidden / out) axes; all padding exact zeros ---
    w1_p = jnp.pad(w1, ((0, 0), (0, HIDDEN_PAD - HIDDEN))).astype(jnp.bfloat16)
    b1_p = jnp.pad(b1, (0, HIDDEN_PAD - HIDDEN)).reshape(1, HIDDEN_PAD)
    w2_p = jnp.pad(w2, ((0, HIDDEN_PAD - HIDDEN), (0, OUT_PAD - OUT_FEATURES)))
    b2_p = jnp.pad(b2, (0, OUT_PAD - OUT_FEATURES)).reshape(1, OUT_PAD)

    # --- batch tiling: no HBM batch padding; ragged last block is masked by Pallas ---
    if B <= MAX_TB:
        tb = B                                              # single block (full-dim block is legal)
    else:
        # keep >= 2 grid steps so the parallel batch axis uses both TensorCores on v7x
        tb = min(MAX_TB, _round_up(pl.cdiv(B, 2), 8))
    grid = (pl.cdiv(B, tb),)

    flops = 2 * B * FEAT * HIDDEN_PAD + 2 * B * HIDDEN_PAD * OUT_PAD
    bytes_accessed = (
        2 * B * FEAT                    # bf16 activation tiles in
        + 2 * FEAT * HIDDEN_PAD         # bf16 w1
        + 4 * HIDDEN_PAD * OUT_PAD      # f32 w2
        + 4 * B * OUT_PAD               # f32 out tiles
    )

    resident = dict(pipeline_mode=pl.Buffered(1))           # grid-invariant operands: 1 buffer

    out = pl.pallas_call(
        _mlp_kernel,
        out_shape=jax.ShapeDtypeStruct((B, OUT_PAD), jnp.float32),
        grid_spec=pltpu.PrefetchScalarGridSpec(
            num_scalar_prefetch=0,
            grid=grid,
            in_specs=[
                pl.BlockSpec((tb, FEAT), lambda i: (i, 0)),                       # x (tiled)
                pl.BlockSpec((FEAT, HIDDEN_PAD), lambda i: (0, 0), **resident),   # w1
                pl.BlockSpec((1, HIDDEN_PAD), lambda i: (0, 0), **resident),      # b1
                pl.BlockSpec((HIDDEN_PAD, OUT_PAD), lambda i: (0, 0), **resident),# w2
                pl.BlockSpec((1, OUT_PAD), lambda i: (0, 0), **resident),         # b2
            ],
            out_specs=pl.BlockSpec((tb, OUT_PAD), lambda i: (i, 0)),
        ),
        compiler_params=pltpu.CompilerParams(
            dimension_semantics=("parallel",),
            vmem_limit_bytes=32 * 1024 * 1024,
        ),
        cost_estimate=pl.CostEstimate(
            flops=flops, transcendentals=0, bytes_accessed=bytes_accessed
        ),
    )(x, w1_p, b1_p, w2_p, b2_p)

    return out[:, :OUT_FEATURES]


def init_params(key, vocab_size=100):
    k0, k1, k2, k3, k4 = jax.random.split(key, 5)
    word2vec = jax.random.normal(k0, (vocab_size, EMB_DIM), jnp.float32) * 0.1

    # Deterministic init mimicking nn.Linear's uniform(-1/sqrt(fan_in), 1/sqrt(fan_in)).
    lim1 = 1.0 / jnp.sqrt(jnp.float32(FEAT))
    w1 = jax.random.uniform(k1, (FEAT, HIDDEN), jnp.float32, -lim1, lim1)
    b1 = jax.random.uniform(k2, (HIDDEN,), jnp.float32, -lim1, lim1)

    lim2 = 1.0 / jnp.sqrt(jnp.float32(HIDDEN))
    w2 = jax.random.uniform(k3, (HIDDEN, OUT_FEATURES), jnp.float32, -lim2, lim2)
    b2 = jax.random.uniform(k4, (OUT_FEATURES,), jnp.float32, -lim2, lim2)

    return {"word2vec": word2vec, "w1": w1, "b1": b1, "w2": w2, "b2": b2}


def _reference(x_ids, params):
    emb = jnp.take(params["word2vec"], x_ids, axis=0).reshape(x_ids.shape[0], -1)
    h = jnp.maximum(emb @ params["w1"] + params["b1"], 0.0)
    return h @ params["w2"] + params["b2"]


if __name__ == "__main__":
    key = jax.random.PRNGKey(0)
    kp, kx = jax.random.split(key)

    vocab_size = 100
    batch = 2
    params = init_params(kp, vocab_size=vocab_size)
    x_ids = jax.random.randint(kx, (batch, MAX_LENGTH), 0, vocab_size, jnp.int32)

    out = mlp_forward(x_ids, params)
    out = jax.block_until_ready(out)

    ref = _reference(x_ids, params)
    assert out.shape == (batch, OUT_FEATURES), out.shape
    # bf16 embedding/fc1 path (f32 accumulation): tolerance relaxed vs pure-f32.
    assert jnp.allclose(out, ref, atol=2e-2, rtol=2e-2), (out, ref)

    print("KERNEL_OK")
</pallas_src>

<mosaic_0001>
module attributes {stable_mosaic.version = 11 : i64} {
  func.func @_mlp_kernel(%arg0: i32, %arg1: memref<2x2500xbf16, #tpu.memory_space<vmem>>, %arg2: memref<2500x128xbf16, #tpu.memory_space<vmem>>, %arg3: memref<1x128xf32, #tpu.memory_space<vmem>>, %arg4: memref<128x128xf32, #tpu.memory_space<vmem>>, %arg5: memref<1x128xf32, #tpu.memory_space<vmem>>, %arg6: memref<2x128xf32, #tpu.memory_space<vmem>>) attributes {dimension_semantics = [#tpu.dimension_semantics<parallel>], iteration_bounds = array<i64: 1>, scalar_prefetch = 0 : i64, scratch_operands = 0 : i64, tpu.core_type = #tpu.core_type<tc>, window_params = [{transform_indices = @transform_0, window_bounds = array<i64: 2, 2500>}, {pipeline_mode = #tpu.pipeline_mode<synchronous>, transform_indices = @transform_1, window_bounds = array<i64: 2500, 128>}, {pipeline_mode = #tpu.pipeline_mode<synchronous>, transform_indices = @transform_2, window_bounds = array<i64: 1, 128>}, {pipeline_mode = #tpu.pipeline_mode<synchronous>, transform_indices = @transform_3, window_bounds = array<i64: 128, 128>}, {pipeline_mode = #tpu.pipeline_mode<synchronous>, transform_indices = @transform_4, window_bounds = array<i64: 1, 128>}, {transform_indices = @transform_5, window_bounds = array<i64: 2, 128>}]} {
    %c0 = arith.constant 0 : index
    %c0_0 = arith.constant 0 : index
    %0 = vector.load %arg1[%c0, %c0_0] : memref<2x2500xbf16, #tpu.memory_space<vmem>>, vector<2x2500xbf16>
    %c0_1 = arith.constant 0 : index
    %c0_2 = arith.constant 0 : index
    %1 = vector.load %arg2[%c0_1, %c0_2] : memref<2500x128xbf16, #tpu.memory_space<vmem>>, vector<2500x128xbf16>
    %cst = arith.constant dense<0.000000e+00> : vector<2x128xf32>
    %2 = tpu.matmul %0, %1, %cst {dimension_numbers = #tpu.dot_dimension_numbers<[1], [0], [0], [1], [0, 0, 1, 1], [], []>} : vector<2x2500xbf16>, vector<2500x128xbf16>, vector<2x128xf32> -> vector<2x128xf32>
    %c0_3 = arith.constant 0 : index
    %c0_4 = arith.constant 0 : index
    %3 = vector.load %arg3[%c0_3, %c0_4] : memref<1x128xf32, #tpu.memory_space<vmem>>, vector<1x128xf32>
    %4 = vector.broadcast %3 : vector<1x128xf32> to vector<2x128xf32>
    %5 = arith.addf %2, %4 : vector<2x128xf32>
    %cst_5 = arith.constant 0.000000e+00 : f32
    %6 = vector.broadcast %cst_5 : f32 to vector<2x128xf32>
    %7 = arith.maximumf %5, %6 : vector<2x128xf32>
    %c0_6 = arith.constant 0 : index
    %c0_7 = arith.constant 0 : index
    %8 = vector.load %arg4[%c0_6, %c0_7] : memref<128x128xf32, #tpu.memory_space<vmem>>, vector<128x128xf32>
    %cst_8 = arith.constant dense<0.000000e+00> : vector<2x128xf32>
    %9 = tpu.matmul %7, %8, %cst_8 {dimension_numbers = #tpu.dot_dimension_numbers<[1], [0], [0], [1], [0, 0, 1, 1], [], []>} : vector<2x128xf32>, vector<128x128xf32>, vector<2x128xf32> -> vector<2x128xf32>
    %c0_9 = arith.constant 0 : index
    %c0_10 = arith.constant 0 : index
    %10 = vector.load %arg5[%c0_9, %c0_10] : memref<1x128xf32, #tpu.memory_space<vmem>>, vector<1x128xf32>
    %11 = vector.broadcast %10 : vector<1x128xf32> to vector<2x128xf32>
    %12 = arith.addf %9, %11 : vector<2x128xf32>
    %c0_11 = arith.constant 0 : index
    %c0_12 = arith.constant 0 : index
    %13 = vector.load %arg6[%c0_11, %c0_12] : memref<2x128xf32, #tpu.memory_space<vmem>>, vector<2x128xf32>
    tpu.vector_store %arg6[%c0_11, %c0_12], %12 {strides = array<i32>} : memref<2x128xf32, #tpu.memory_space<vmem>>, vector<2x128xf32>,
    return
  }
  func.func @transform_0(%arg0: i32) -> (i32, i32) {
    %c0_i32 = arith.constant 0 : i32
    %c0_i32_0 = arith.constant 0 : i32
    return %arg0, %c0_i32 : i32, i32
  }
  func.func @transform_1(%arg0: i32) -> (i32, i32) {
    %c0_i32 = arith.constant 0 : i32
    %c0_i32_0 = arith.constant 0 : i32
    %c0_i32_1 = arith.constant 0 : i32
    return %c0_i32, %c0_i32_0 : i32, i32
  }
  func.func @transform_2(%arg0: i32) -> (i32, i32) {
    %c0_i32 = arith.constant 0 : i32
    %c0_i32_0 = arith.constant 0 : i32
    %c0_i32_1 = arith.constant 0 : i32
    return %c0_i32, %c0_i32_0 : i32, i32
  }
  func.func @transform_3(%arg0: i32) -> (i32, i32) {
    %c0_i32 = arith.constant 0 : i32
    %c0_i32_0 = arith.constant 0 : i32
    %c0_i32_1 = arith.constant 0 : i32
    return %c0_i32, %c0_i32_0 : i32, i32
  }
  func.func @transform_4(%arg0: i32) -> (i32, i32) {
    %c0_i32 = arith.constant 0 : i32
    %c0_i32_0 = arith.constant 0 : i32
    %c0_i32_1 = arith.constant 0 : i32
    return %c0_i32, %c0_i32_0 : i32, i32
  }
  func.func @transform_5(%arg0: i32) -> (i32, i32) {
    %c0_i32 = arith.constant 0 : i32
    %c0_i32_0 = arith.constant 0 : i32
    return %arg0, %c0_i32 : i32, i32
  }
}

</mosaic_0001>

<llo_original>
// kernel: mlp_forward.1
$region0: #{mlp_forward.1}
  #allocation0 [shape = 'u32[]', space=smem, size = 0x4, offset = 0x4, fixed_abs, tag = 'smem constant byte address 0x4 - core index']
  #allocation1 [shape = 'u32[144,128]{1,0:T(1,128)}', space=vmem, size = 0x12000, scoped, tag = 'internal scratch']
  %s0 = inlined_call_operand.vmem [shape: bf16[2,2500], index: 0, kind: input, shape index: {}]
  %s1 = inlined_call_operand.vmem [shape: bf16[2500,128], index: 1, kind: input, shape index: {}]
  %s2 = inlined_call_operand.vmem [shape: f32[1,128], index: 2, kind: input, shape index: {}]
  %s3 = inlined_call_operand.vmem [shape: f32[128,128], index: 3, kind: input, shape index: {}]
  %s4 = inlined_call_operand.vmem [shape: f32[1,128], index: 4, kind: input, shape index: {}]
  %s5 = inlined_call_operand.hbm [shape: f32[2,128], index: 5, kind: output, shape index: {}]
  %s6 = sld [smem:[#allocation0]]
  $region30: #{mlp_forward.1} parent=0
    _
  %s8 = ssub.s32 1, %s6
  %s9 = scalar_select 0, %s8, %s6
  $region1: #{mlp_forward.1} parent=0
    #allocation2 [shape = 'u8[1024]{0}', space=vmem, size = 0x400, scoped, tag = 'output window, operand 0, single buffered']
    #allocation3 [shape = 's32[1]{0}', space=sflag, size = 0x4, scoped, tag = 'scoped memory for mlp_forward.1']
    %10 = vsyncpa [#allocation3], 0
    // Predicated region
    $region2: #{mlp_forward.1} parent=1 // pred_check
      _
    $region3: #{mlp_forward.1} parent=1 // pred_check_branch
      %12 = sbr.rel (0) target = $region5
    $region4: #{mlp_forward.1} parent=1 // pred_region
      _
    $region5: #{mlp_forward.1} parent=1 // pred_fallthru
      _
    // Predicated region
    $region6: #{mlp_forward.1} parent=1 // pred_check
      _
    $region7: #{mlp_forward.1} parent=1 // pred_check_branch
      %14 = sbr.rel (0) target = $region9
    $region8: #{mlp_forward.1} parent=1 // pred_region
      _
    $region9: #{mlp_forward.1} parent=1 // pred_fallthru
      _
    // Predicated region
    $region10: #{mlp_forward.1} parent=1 // pred_check
      _
    $region11: #{mlp_forward.1} parent=1 // pred_check_branch
      %16 = sbr.rel (0) target = $region13
    $region12: #{mlp_forward.1} parent=1 // pred_region
      _
    $region13: #{mlp_forward.1} parent=1 // pred_fallthru
      _
    // Predicated region
    $region14: #{mlp_forward.1} parent=1 // pred_check
      _
    $region15: #{mlp_forward.1} parent=1 // pred_check_branch
      %18 = sbr.rel (0) target = $region17
    $region16: #{mlp_forward.1} parent=1 // pred_region
      _
    $region17: #{mlp_forward.1} parent=1 // pred_fallthru
      _
    // Predicated region
    $region18: #{mlp_forward.1} parent=1 // pred_check
      _
    $region19: #{mlp_forward.1} parent=1 // pred_check_branch
      %20 = sbr.rel (0) target = $region21
    $region20: #{mlp_forward.1} parent=1 // pred_region
      _
    $region21: #{mlp_forward.1} parent=1 // pred_fallthru
      _
    %v22 = vld [vmem:[%s0] sm:$0xff]
    %v23 = vld [vmem:[%s0 + $0x8] sm:$0xff]
    %v24 = vld [vmem:[%s0 + $0x10] sm:$0xf]
    %v25 = vld [vmem:[%s1] sm:$0xf]
    %v26 = vld [vmem:[%s1 + $0x4] sm:$0xf]
    %v27 = vld [vmem:[%s1 + $0x8] sm:$0xf]
    %v28 = vld [vmem:[%s1 + $0xc] sm:$0xf]
    %v29 = vld [vmem:[%s1 + $0x10] sm:$0xf]
    %v30 = vld [vmem:[%s1 + $0x14] sm:$0xf]
    %v31 = vld [vmem:[%s1 + $0x18] sm:$0xf]
    %v32 = vld [vmem:[%s1 + $0x1c] sm:$0xf]
    %v33 = vld [vmem:[%s1 + $0x20] sm:$0xf]
    %v34 = vld [vmem:[%s1 + $0x24] sm:$0xf]
    %v35 = vld [vmem:[%s1 + $0x28] sm:$0xf]
    %v36 = vld [vmem:[%s1 + $0x2c] sm:$0xf]
    %v37 = vld [vmem:[%s1 + $0x30] sm:$0xf]
    %v38 = vld [vmem:[%s1 + $0x34] sm:$0xf]
    %v39 = vld [vmem:[%s1 + $0x38] sm:$0xf]
    %v40 = vld [vmem:[%s1 + $0x3c] sm:$0xf]
    %v41 = vld [vmem:[%s1 + $0x40] sm:$0xf]
    %v42 = vld [vmem:[%s1 + $0x44] sm:$0xf]
    %v43 = vld [vmem:[%s1 + $0x48] sm:$0xf]
    %v44 = vld [vmem:[%s1 + $0x4c] sm:$0xf]
    %v45 = vld [vmem:[%s1 + $0x50] sm:$0xf]
    %v46 = vld [vmem:[%s1 + $0x54] sm:$0xf]
    %v47 = vld [vmem:[%s1 + $0x58] sm:$0xf]
    %v48 = vld [vmem:[%s1 + $0x5c] sm:$0xf]
    %v49 = vld [vmem:[%s1 + $0x60] sm:$0xf]
    %v50 = vld [vmem:[%s1 + $0x64] sm:$0xf]
    %v51 = vld [vmem:[%s1 + $0x68] sm:$0xf]
    %v52 = vld [vmem:[%s1 + $0x6c] sm:$0xf]
    %v53 = vld [vmem:[%s1 + $0x70] sm:$0xf]
    %v54 = vld [vmem:[%s1 + $0x74] sm:$0xf]
    %v55 = vld [vmem:[%s1 + $0x78] sm:$0xf]
    %v56 = vld [vmem:[%s1 + $0x7c] sm:$0xf]
    %v57 = vld [vmem:[%s1 + $0x80] sm:$0xf]
    %v58 = vld [vmem:[%s1 + $0x84] sm:$0xf]
    %v59 = vld [vmem:[%s1 + $0x88] sm:$0xf]
    %v60 = vld [vmem:[%s1 + $0x8c] sm:$0xf]
    %v61 = vld [vmem:[%s1 + $0x90] sm:$0xf]
    %v62 = vld [vmem:[%s1 + $0x94] sm:$0xf]
    %v63 = vld [vmem:[%s1 + $0x98] sm:$0xf]
    %v64 = vld [vmem:[%s1 + $0x9c] sm:$0xf]
    %v65 = vld [vmem:[%s1 + $0xa0] sm:$0xf]
    %v66 = vld [vmem:[%s1 + $0xa4] sm:$0xf]
    %v67 = vld [vmem:[%s1 + $0xa8] sm:$0xf]
    %v68 = vld [vmem:[%s1 + $0xac] sm:$0xf]
    %v69 = vld [vmem:[%s1 + $0xb0] sm:$0xf]
    %v70 = vld [vmem:[%s1 + $0xb4] sm:$0xf]
    %v71 = vld [vmem:[%s1 + $0xb8] sm:$0xf]
    %v72 = vld [vmem:[%s1 + $0xbc] sm:$0xf]
    %v73 = vld [vmem:[%s1 + $0xc0] sm:$0xf]
    %v74 = vld [vmem:[%s1 + $0xc4] sm:$0xf]
    %v75 = vld [vmem:[%s1 + $0xc8] sm:$0xf]
    %v76 = vld [vmem:[%s1 + $0xcc] sm:$0xf]
    %v77 = vld [vmem:[%s1 + $0xd0] sm:$0xf]
    %v78 = vld [vmem:[%s1 + $0xd4] sm:$0xf]
    %v79 = vld [vmem:[%s1 + $0xd8] sm:$0xf]
    %v80 = vld [vmem:[%s1 + $0xdc] sm:$0xf]
    %v81 = vld [vmem:[%s1 + $0xe0] sm:$0xf]
    %v82 = vld [vmem:[%s1 + $0xe4] sm:$0xf]
    %v83 = vld [vmem:[%s1 + $0xe8] sm:$0xf]
    %v84 = vld [vmem:[%s1 + $0xec] sm:$0xf]
    %v85 = vld [vmem:[%s1 + $0xf0] sm:$0xf]
    %v86 = vld [vmem:[%s1 + $0xf4] sm:$0xf]
    %v87 = vld [vmem:[%s1 + $0xf8] sm:$0xf]
    %v88 = vld [vmem:[%s1 + $0xfc] sm:$0xf]
    %v89 = vld [vmem:[%s1 + $0x100] sm:$0xf]
    %v90 = vld [vmem:[%s1 + $0x104] sm:$0xf]
    %v91 = vld [vmem:[%s1 + $0x108] sm:$0xf]
    %v92 = vld [vmem:[%s1 + $0x10c] sm:$0xf]
    %v93 = vld [vmem:[%s1 + $0x110] sm:$0xf]
    %v94 = vld [vmem:[%s1 + $0x114] sm:$0xf]
    %v95 = vld [vmem:[%s1 + $0x118] sm:$0xf]
    %v96 = vld [vmem:[%s1 + $0x11c] sm:$0xf]
    %v97 = vld [vmem:[%s1 + $0x120] sm:$0xf]
    %v98 = vld [vmem:[%s1 + $0x124] sm:$0xf]
    %v99 = vld [vmem:[%s1 + $0x128] sm:$0xf]
    %v100 = vld [vmem:[%s1 + $0x12c] sm:$0xf]
    %v101 = vld [vmem:[%s1 + $0x130] sm:$0xf]
    %v102 = vld [vmem:[%s1 + $0x134] sm:$0xf]
    %v103 = vld [vmem:[%s1 + $0x138] sm:$0xf]
    %v104 = vld [vmem:[%s1 + $0x13c] sm:$0xf]
    %v105 = vld [vmem:[%s1 + $0x140] sm:$0xf]
    %v106 = vld [vmem:[%s1 + $0x144] sm:$0xf]
    %v107 = vld [vmem:[%s1 + $0x148] sm:$0xf]
    %v108 = vld [vmem:[%s1 + $0x14c] sm:$0xf]
    %v109 = vld [vmem:[%s1 + $0x150] sm:$0xf]
    %v110 = vld [vmem:[%s1 + $0x154] sm:$0xf]
    %v111 = vld [vmem:[%s1 + $0x158] sm:$0xf]
    %v112 = vld [vmem:[%s1 + $0x15c] sm:$0xf]
    %v113 = vld [vmem:[%s1 + $0x160] sm:$0xf]
    %v114 = vld [vmem:[%s1 + $0x164] sm:$0xf]
    %v115 = vld [vmem:[%s1 + $0x168] sm:$0xf]
    %v116 = vld [vmem:[%s1 + $0x16c] sm:$0xf]
    %v117 = vld [vmem:[%s1 + $0x170] sm:$0xf]
    %v118 = vld [vmem:[%s1 + $0x174] sm:$0xf]
    %v119 = vld [vmem:[%s1 + $0x178] sm:$0xf]
    %v120 = vld [vmem:[%s1 + $0x17c] sm:$0xf]
    %v121 = vld [vmem:[%s1 + $0x180] sm:$0xf]
    %v122 = vld [vmem:[%s1 + $0x184] sm:$0xf]
    %v123 = vld [vmem:[%s1 + $0x188] sm:$0xf]
    %v124 = vld [vmem:[%s1 + $0x18c] sm:$0xf]
    %v125 = vld [vmem:[%s1 + $0x190] sm:$0xf]
    %v126 = vld [vmem:[%s1 + $0x194] sm:$0xf]
    %v127 = vld [vmem:[%s1 + $0x198] sm:$0xf]
    %v128 = vld [vmem:[%s1 + $0x19c] sm:$0xf]
    %v129 = vld [vmem:[%s1 + $0x1a0] sm:$0xf]
    %v130 = vld [vmem:[%s1 + $0x1a4] sm:$0xf]
    %v131 = vld [vmem:[%s1 + $0x1a8] sm:$0xf]
    %v132 = vld [vmem:[%s1 + $0x1ac] sm:$0xf]
    %v133 = vld [vmem:[%s1 + $0x1b0] sm:$0xf]
    %v134 = vld [vmem:[%s1 + $0x1b4] sm:$0xf]
    %v135 = vld [vmem:[%s1 + $0x1b8] sm:$0xf]
    %v136 = vld [vmem:[%s1 + $0x1bc] sm:$0xf]
    %v137 = vld [vmem:[%s1 + $0x1c0] sm:$0xf]
    %v138 = vld [vmem:[%s1 + $0x1c4] sm:$0xf]
    %v139 = vld [vmem:[%s1 + $0x1c8] sm:$0xf]
    %v140 = vld [vmem:[%s1 + $0x1cc] sm:$0xf]
    %v141 = vld [vmem:[%s1 + $0x1d0] sm:$0xf]
    %v142 = vld [vmem:[%s1 + $0x1d4] sm:$0xf]
    %v143 = vld [vmem:[%s1 + $0x1d8] sm:$0xf]
    %v144 = vld [vmem:[%s1 + $0x1dc] sm:$0xf]
    %v145 = vld [vmem:[%s1 + $0x1e0] sm:$0xf]
    %v146 = vld [vmem:[%s1 + $0x1e4] sm:$0xf]
    %v147 = vld [vmem:[%s1 + $0x1e8] sm:$0xf]
    %v148 = vld [vmem:[%s1 + $0x1ec] sm:$0xf]
    %v149 = vld [vmem:[%s1 + $0x1f0] sm:$0xf]
    %v150 = vld [vmem:[%s1 + $0x1f4] sm:$0xf]
    %v151 = vld [vmem:[%s1 + $0x1f8] sm:$0xf]
    %v152 = vld [vmem:[%s1 + $0x1fc] sm:$0xf]
    %v153 = vld [vmem:[%s1 + $0x200] sm:$0xf]
    %v154 = vld [vmem:[%s1 + $0x204] sm:$0xf]
    %v155 = vld [vmem:[%s1 + $0x208] sm:$0xf]
    %v156 = vld [vmem:[%s1 + $0x20c] sm:$0xf]
    %v157 = vld [vmem:[%s1 + $0x210] sm:$0xf]
    %v158 = vld [vmem:[%s1 + $0x214] sm:$0xf]
    %v159 = vld [vmem:[%s1 + $0x218] sm:$0xf]
    %v160 = vld [vmem:[%s1 + $0x21c] sm:$0xf]
    %v161 = vld [vmem:[%s1 + $0x220] sm:$0xf]
    %v162 = vld [vmem:[%s1 + $0x224] sm:$0xf]
    %v163 = vld [vmem:[%s1 + $0x228] sm:$0xf]
    %v164 = vld [vmem:[%s1 + $0x22c] sm:$0xf]
    %v165 = vld [vmem:[%s1 + $0x230] sm:$0xf]
    %v166 = vld [vmem:[%s1 + $0x234] sm:$0xf]
    %v167 = vld [vmem:[%s1 + $0x238] sm:$0xf]
    %v168 = vld [vmem:[%s1 + $0x23c] sm:$0xf]
    %v169 = vld [vmem:[%s1 + $0x240] sm:$0xf]
    %v170 = vld [vmem:[%s1 + $0x244] sm:$0xf]
    %v171 = vld [vmem:[%s1 + $0x248] sm:$0xf]
    %v172 = vld [vmem:[%s1 + $0x24c] sm:$0xf]
    %v173 = vld [vmem:[%s1 + $0x250] sm:$0xf]
    %v174 = vld [vmem:[%s1 + $0x254] sm:$0xf]
    %v175 = vld [vmem:[%s1 + $0x258] sm:$0xf]
    %v176 = vld [vmem:[%s1 + $0x25c] sm:$0xf]
    %v177 = vld [vmem:[%s1 + $0x260] sm:$0xf]
    %v178 = vld [vmem:[%s1 + $0x264] sm:$0xf]
    %v179 = vld [vmem:[%s1 + $0x268] sm:$0xf]
    %v180 = vld [vmem:[%s1 + $0x26c] sm:$0xf]
    %v181 = vld [vmem:[%s1 + $0x270] sm:$0xf]
    %v182 = vld [vmem:[%s1 + $0x274] sm:$0xf]
    %v183 = vld [vmem:[%s1 + $0x278] sm:$0xf]
    %v184 = vld [vmem:[%s1 + $0x27c] sm:$0xf]
    %v185 = vld [vmem:[%s1 + $0x280] sm:$0xf]
    %v186 = vld [vmem:[%s1 + $0x284] sm:$0xf]
    %v187 = vld [vmem:[%s1 + $0x288] sm:$0xf]
    %v188 = vld [vmem:[%s1 + $0x28c] sm:$0xf]
    %v189 = vld [vmem:[%s1 + $0x290] sm:$0xf]
    %v190 = vld [vmem:[%s1 + $0x294] sm:$0xf]
    %v191 = vld [vmem:[%s1 + $0x298] sm:$0xf]
    %v192 = vld [vmem:[%s1 + $0x29c] sm:$0xf]
    %v193 = vld [vmem:[%s1 + $0x2a0] sm:$0xf]
    %v194 = vld [vmem:[%s1 + $0x2a4] sm:$0xf]
    %v195 = vld [vmem:[%s1 + $0x2a8] sm:$0xf]
    %v196 = vld [vmem:[%s1 + $0x2ac] sm:$0xf]
    %v197 = vld [vmem:[%s1 + $0x2b0] sm:$0xf]
    %v198 = vld [vmem:[%s1 + $0x2b4] sm:$0xf]
    %v199 = vld [vmem:[%s1 + $0x2b8] sm:$0xf]
    %v200 = vld [vmem:[%s1 + $0x2bc] sm:$0xf]
    %v201 = vld [vmem:[%s1 + $0x2c0] sm:$0xf]
    %v202 = vld [vmem:[%s1 + $0x2c4] sm:$0xf]
    %v203 = vld [vmem:[%s1 + $0x2c8] sm:$0xf]
    %v204 = vld [vmem:[%s1 + $0x2cc] sm:$0xf]
    %v205 = vld [vmem:[%s1 + $0x2d0] sm:$0xf]
    %v206 = vld [vmem:[%s1 + $0x2d4] sm:$0xf]
    %v207 = vld [vmem:[%s1 + $0x2d8] sm:$0xf]
    %v208 = vld [vmem:[%s1 + $0x2dc] sm:$0xf]
    %v209 = vld [vmem:[%s1 + $0x2e0] sm:$0xf]
    %v210 = vld [vmem:[%s1 + $0x2e4] sm:$0xf]
    %v211 = vld [vmem:[%s1 + $0x2e8] sm:$0xf]
    %v212 = vld [vmem:[%s1 + $0x2ec] sm:$0xf]
    %v213 = vld [vmem:[%s1 + $0x2f0] sm:$0xf]
    %v214 = vld [vmem:[%s1 + $0x2f4] sm:$0xf]
    %v215 = vld [vmem:[%s1 + $0x2f8] sm:$0xf]
    %v216 = vld [vmem:[%s1 + $0x2fc] sm:$0xf]
    %v217 = vld [vmem:[%s1 + $0x300] sm:$0xf]
    %v218 = vld [vmem:[%s1 + $0x304] sm:$0xf]
    %v219 = vld [vmem:[%s1 + $0x308] sm:$0xf]
    %v220 = vld [vmem:[%s1 + $0x30c] sm:$0xf]
    %v221 = vld [vmem:[%s1 + $0x310] sm:$0xf]
    %v222 = vld [vmem:[%s1 + $0x314] sm:$0xf]
    %v223 = vld [vmem:[%s1 + $0x318] sm:$0xf]
    %v224 = vld [vmem:[%s1 + $0x31c] sm:$0xf]
    %v225 = vld [vmem:[%s1 + $0x320] sm:$0xf]
    %v226 = vld [vmem:[%s1 + $0x324] sm:$0xf]
    %v227 = vld [vmem:[%s1 + $0x328] sm:$0xf]
    %v228 = vld [vmem:[%s1 + $0x32c] sm:$0xf]
    %v229 = vld [vmem:[%s1 + $0x330] sm:$0xf]
    %v230 = vld [vmem:[%s1 + $0x334] sm:$0xf]
    %v231 = vld [vmem:[%s1 + $0x338] sm:$0xf]
    %v232 = vld [vmem:[%s1 + $0x33c] sm:$0xf]
    %v233 = vld [vmem:[%s1 + $0x340] sm:$0xf]
    %v234 = vld [vmem:[%s1 + $0x344] sm:$0xf]
    %v235 = vld [vmem:[%s1 + $0x348] sm:$0xf]
    %v236 = vld [vmem:[%s1 + $0x34c] sm:$0xf]
    %v237 = vld [vmem:[%s1 + $0x350] sm:$0xf]
    %v238 = vld [vmem:[%s1 + $0x354] sm:$0xf]
    %v239 = vld [vmem:[%s1 + $0x358] sm:$0xf]
    %v240 = vld [vmem:[%s1 + $0x35c] sm:$0xf]
    %v241 = vld [vmem:[%s1 + $0x360] sm:$0xf]
    %v242 = vld [vmem:[%s1 + $0x364] sm:$0xf]
    %v243 = vld [vmem:[%s1 + $0x368] sm:$0xf]
    %v244 = vld [vmem:[%s1 + $0x36c] sm:$0xf]
    %v245 = vld [vmem:[%s1 + $0x370] sm:$0xf]
    %v246 = vld [vmem:[%s1 + $0x374] sm:$0xf]
    %v247 = vld [vmem:[%s1 + $0x378] sm:$0xf]
    %v248 = vld [vmem:[%s1 + $0x37c] sm:$0xf]
    %v249 = vld [vmem:[%s1 + $0x380] sm:$0xf]
    %v250 = vld [vmem:[%s1 + $0x384] sm:$0xf]
    %v251 = vld [vmem:[%s1 + $0x388] sm:$0xf]
    %v252 = vld [vmem:[%s1 + $0x38c] sm:$0xf]
    %v253 = vld [vmem:[%s1 + $0x390] sm:$0xf]
    %v254 = vld [vmem:[%s1 + $0x394] sm:$0xf]
    %v255 = vld [vmem:[%s1 + $0x398] sm:$0xf]
    %v256 = vld [vmem:[%s1 + $0x39c] sm:$0xf]
    %v257 = vld [vmem:[%s1 + $0x3a0] sm:$0xf]
    %v258 = vld [vmem:[%s1 + $0x3a4] sm:$0xf]
    %v259 = vld [vmem:[%s1 + $0x3a8] sm:$0xf]
    %v260 = vld [vmem:[%s1 + $0x3ac] sm:$0xf]
    %v261 = vld [vmem:[%s1 + $0x3b0] sm:$0xf]
    %v262 = vld [vmem:[%s1 + $0x3b4] sm:$0xf]
    %v263 = vld [vmem:[%s1 + $0x3b8] sm:$0xf]
    %v264 = vld [vmem:[%s1 + $0x3bc] sm:$0xf]
    %v265 = vld [vmem:[%s1 + $0x3c0] sm:$0xf]
    %v266 = vld [vmem:[%s1 + $0x3c4] sm:$0xf]
    %v267 = vld [vmem:[%s1 + $0x3c8] sm:$0xf]
    %v268 = vld [vmem:[%s1 + $0x3cc] sm:$0xf]
    %v269 = vld [vmem:[%s1 + $0x3d0] sm:$0xf]
    %v270 = vld [vmem:[%s1 + $0x3d4] sm:$0xf]
    %v271 = vld [vmem:[%s1 + $0x3d8] sm:$0xf]
    %v272 = vld [vmem:[%s1 + $0x3dc] sm:$0xf]
    %v273 = vld [vmem:[%s1 + $0x3e0] sm:$0xf]
    %v274 = vld [vmem:[%s1 + $0x3e4] sm:$0xf]
    %v275 = vld [vmem:[%s1 + $0x3e8] sm:$0xf]
    %v276 = vld [vmem:[%s1 + $0x3ec] sm:$0xf]
    %v277 = vld [vmem:[%s1 + $0x3f0] sm:$0xf]
    %v278 = vld [vmem:[%s1 + $0x3f4] sm:$0xf]
    %v279 = vld [vmem:[%s1 + $0x3f8] sm:$0xf]
    %v280 = vld [vmem:[%s1 + $0x3fc] sm:$0xf]
    %v281 = vld [vmem:[%s1 + $0x400] sm:$0xf]
    %v282 = vld [vmem:[%s1 + $0x404] sm:$0xf]
    %v283 = vld [vmem:[%s1 + $0x408] sm:$0xf]
    %v284 = vld [vmem:[%s1 + $0x40c] sm:$0xf]
    %v285 = vld [vmem:[%s1 + $0x410] sm:$0xf]
    %v286 = vld [vmem:[%s1 + $0x414] sm:$0xf]
    %v287 = vld [vmem:[%s1 + $0x418] sm:$0xf]
    %v288 = vld [vmem:[%s1 + $0x41c] sm:$0xf]
    %v289 = vld [vmem:[%s1 + $0x420] sm:$0xf]
    %v290 = vld [vmem:[%s1 + $0x424] sm:$0xf]
    %v291 = vld [vmem:[%s1 + $0x428] sm:$0xf]
    %v292 = vld [vmem:[%s1 + $0x42c] sm:$0xf]
    %v293 = vld [vmem:[%s1 + $0x430] sm:$0xf]
    %v294 = vld [vmem:[%s1 + $0x434] sm:$0xf]
    %v295 = vld [vmem:[%s1 + $0x438] sm:$0xf]
    %v296 = vld [vmem:[%s1 + $0x43c] sm:$0xf]
    %v297 = vld [vmem:[%s1 + $0x440] sm:$0xf]
    %v298 = vld [vmem:[%s1 + $0x444] sm:$0xf]
    %v299 = vld [vmem:[%s1 + $0x448] sm:$0xf]
    %v300 = vld [vmem:[%s1 + $0x44c] sm:$0xf]
    %v301 = vld [vmem:[%s1 + $0x450] sm:$0xf]
    %v302 = vld [vmem:[%s1 + $0x454] sm:$0xf]
    %v303 = vld [vmem:[%s1 + $0x458] sm:$0xf]
    %v304 = vld [vmem:[%s1 + $0x45c] sm:$0xf]
    %v305 = vld [vmem:[%s1 + $0x460] sm:$0xf]
    %v306 = vld [vmem:[%s1 + $0x464] sm:$0xf]
    %v307 = vld [vmem:[%s1 + $0x468] sm:$0xf]
    %v308 = vld [vmem:[%s1 + $0x46c] sm:$0xf]
    %v309 = vld [vmem:[%s1 + $0x470] sm:$0xf]
    %v310 = vld [vmem:[%s1 + $0x474] sm:$0xf]
    %v311 = vld [vmem:[%s1 + $0x478] sm:$0xf]
    %v312 = vld [vmem:[%s1 + $0x47c] sm:$0xf]
    %v313 = vld [vmem:[%s1 + $0x480] sm:$0xf]
    %v314 = vld [vmem:[%s1 + $0x484] sm:$0xf]
    %v315 = vld [vmem:[%s1 + $0x488] sm:$0xf]
    %v316 = vld [vmem:[%s1 + $0x48c] sm:$0xf]
    %v317 = vld [vmem:[%s1 + $0x490] sm:$0xf]
    %v318 = vld [vmem:[%s1 + $0x494] sm:$0xf]
    %v319 = vld [vmem:[%s1 + $0x498] sm:$0xf]
    %v320 = vld [vmem:[%s1 + $0x49c] sm:$0xf]
    %v321 = vld [vmem:[%s1 + $0x4a0] sm:$0xf]
    %v322 = vld [vmem:[%s1 + $0x4a4] sm:$0xf]
    %v323 = vld [vmem:[%s1 + $0x4a8] sm:$0xf]
    %v324 = vld [vmem:[%s1 + $0x4ac] sm:$0xf]
    %v325 = vld [vmem:[%s1 + $0x4b0] sm:$0xf]
    %v326 = vld [vmem:[%s1 + $0x4b4] sm:$0xf]
    %v327 = vld [vmem:[%s1 + $0x4b8] sm:$0xf]
    %v328 = vld [vmem:[%s1 + $0x4bc] sm:$0xf]
    %v329 = vld [vmem:[%s1 + $0x4c0] sm:$0xf]
    %v330 = vld [vmem:[%s1 + $0x4c4] sm:$0xf]
    %v331 = vld [vmem:[%s1 + $0x4c8] sm:$0xf]
    %v332 = vld [vmem:[%s1 + $0x4cc] sm:$0xf]
    %v333 = vld [vmem:[%s1 + $0x4d0] sm:$0xf]
    %v334 = vld [vmem:[%s1 + $0x4d4] sm:$0xf]
    %v335 = vld [vmem:[%s1 + $0x4d8] sm:$0xf]
    %v336 = vld [vmem:[%s1 + $0x4dc] sm:$0xf]
    %v337 = vld [vmem:[%s1 + $0x4e0] sm:$0x3]
    %v338 = vld [vmem:[%s2] sm:$0x1]
    %v340 = vlaneseq
    %v341 = vshrl.u32 %v340, 7
    %v342 = vsub.s32 0, %v341
    %v343 = vrot.slane %v338, %v342
    %v348 = vcombine.high %v22, %v22
    %v350 = vunpack.c.l.s4 1966171168
    %v351 = vunpack.c.0.s8 %v350
    %v352 = vlaneseq
    %v353 = vshrl.u32 %v352, 7
    %v354 = vsub.s32 %v351, %v353
    %v355 = vrot.slane %v22, %v354
    %v357 = vunpack.c.l.s4 1966171168
    %v358 = vunpack.c.0.s8 %v357
    %v359 = vlaneseq
    %v360 = vshrl.u32 %v359, 7
    %v361 = vsub.s32 %v358, %v360
    %v362 = vrot.slane %v348, %v361
    %v363 = vcombine.high %v355, %v355
    %v364 = vcombine.high %v362, %v362
    %v366 = vunpack.c.l.s4 1966171168
    %v367 = vunpack.c.0.s8 %v366
    %v368 = vlaneseq
    %v369 = vshrl.u32 %v368, 7
    %v370 = vsub.s32 %v367, %v369
    %v371 = vrot.slane %v355, %v370
    %v373 = vunpack.c.l.s4 1966171168
    %v374 = vunpack.c.0.s8 %v373
    %v375 = vlaneseq
    %v376 = vshrl.u32 %v375, 7
    %v377 = vsub.s32 %v374, %v376
    %v378 = vrot.slane %v362, %v377
    %v380 = vunpack.c.l.s4 1966171168
    %v381 = vunpack.c.0.s8 %v380
    %v382 = vlaneseq
    %v383 = vshrl.u32 %v382, 7
    %v384 = vsub.s32 %v381, %v383
    %v385 = vrot.slane %v363, %v384
    %v387 = vunpack.c.l.s4 1966171168
    %v388 = vunpack.c.0.s8 %v387
    %v389 = vlaneseq
    %v390 = vshrl.u32 %v389, 7
    %v391 = vsub.s32 %v388, %v390
    %v392 = vrot.slane %v364, %v391
    %v393 = vcombine.high %v371, %v371
    %v394 = vcombine.high %v378, %v378
    %v395 = vcombine.high %v385, %v385
    %v396 = vcombine.high %v392, %v392
    %v397 = vcombine.high %v23, %v23
    %v399 = vunpack.c.l.s4 1966171168
    %v400 = vunpack.c.0.s8 %v399
    %v401 = vlaneseq
    %v402 = vshrl.u32 %v401, 7
    %v403 = vsub.s32 %v400, %v402
    %v404 = vrot.slane %v23, %v403
    %v406 = vunpack.c.l.s4 1966171168
    %v407 = vunpack.c.0.s8 %v406
    %v408 = vlaneseq
    %v409 = vshrl.u32 %v408, 7
    %v410 = vsub.s32 %v407, %v409
    %v411 = vrot.slane %v397, %v410
    %v412 = vcombine.high %v404, %v404
    %v413 = vcombine.high %v411, %v411
    %v415 = vunpack.c.l.s4 1966171168
    %v416 = vunpack.c.0.s8 %v415
    %v417 = vlaneseq
    %v418 = vshrl.u32 %v417, 7
    %v419 = vsub.s32 %v416, %v418
    %v420 = vrot.slane %v404, %v419
    %v422 = vunpack.c.l.s4 1966171168
    %v423 = vunpack.c.0.s8 %v422
    %v424 = vlaneseq
    %v425 = vshrl.u32 %v424, 7
    %v426 = vsub.s32 %v423, %v425
    %v427 = vrot.slane %v411, %v426
    %v429 = vunpack.c.l.s4 1966171168
    %v430 = vunpack.c.0.s8 %v429
    %v431 = vlaneseq
    %v432 = vshrl.u32 %v431, 7
    %v433 = vsub.s32 %v430, %v432
    %v434 = vrot.slane %v412, %v433
    %v436 = vunpack.c.l.s4 1966171168
    %v437 = vunpack.c.0.s8 %v436
    %v438 = vlaneseq
    %v439 = vshrl.u32 %v438, 7
    %v440 = vsub.s32 %v437, %v439
    %v441 = vrot.slane %v413, %v440
    %v442 = vcombine.high %v420, %v420
    %v443 = vcombine.high %v427, %v427
    %v444 = vcombine.high %v434, %v434
    %v445 = vcombine.high %v441, %v441
    %v447 = vunpack.c.l.s4 1966171168
    %v448 = vunpack.c.0.s8 %v447
    %v449 = vlaneseq
    %v450 = vshrl.u32 %v449, 7
    %v451 = vsub.s32 %v448, %v450
    %v452 = vrot.slane %v24, %v451
    %v453 = vcombine.high %v452, %v452
    %v455 = vunpack.c.l.s4 1966171168
    %v456 = vunpack.c.0.s8 %v455
    %v457 = vlaneseq
    %v458 = vshrl.u32 %v457, 7
    %v459 = vsub.s32 %v456, %v458
    %v460 = vrot.slane %v452, %v459
    %v462 = vunpack.c.l.s4 1966171168
    %v463 = vunpack.c.0.s8 %v462
    %v464 = vlaneseq
    %v465 = vshrl.u32 %v464, 7
    %v466 = vsub.s32 %v463, %v465
    %v467 = vrot.slane %v453, %v466
    %v468 = vcombine.high %v460, %v460
    %v469 = vcombine.high %v467, %v467
    %v802 = vunpack.c.l.b16 %v25
    %v803 = vunpack.c.l.b16 %v26
    %v804 = vunpack.c.l.b16 %v27
    %v805 = vunpack.c.l.b16 %v28
    %v806 = vunpack.c.l.b16 %v29
    %v807 = vunpack.c.l.b16 %v30
    %v808 = vunpack.c.l.b16 %v31
    %v809 = vunpack.c.l.b16 %v32
    %v810 = vunpack.c.l.b16 %v33
    %v811 = vunpack.c.l.b16 %v34
    %v812 = vunpack.c.l.b16 %v35
    %v813 = vunpack.c.l.b16 %v36
    %v814 = vunpack.c.l.b16 %v37
    %v815 = vunpack.c.l.b16 %v38
    %v816 = vunpack.c.l.b16 %v39
    %v817 = vunpack.c.l.b16 %v40
    %v818 = vunpack.c.l.b16 %v41
    %v819 = vunpack.c.l.b16 %v42
    %v820 = vunpack.c.l.b16 %v43
    %v821 = vunpack.c.l.b16 %v44
    %v822 = vunpack.c.l.b16 %v45
    %v823 = vunpack.c.l.b16 %v46
    %v824 = vunpack.c.l.b16 %v47
    %v825 = vunpack.c.l.b16 %v48
    %v826 = vunpack.c.l.b16 %v49
    %v827 = vunpack.c.l.b16 %v50
    %v828 = vunpack.c.l.b16 %v51
    %v829 = vunpack.c.l.b16 %v52
    %v830 = vunpack.c.l.b16 %v53
    %v831 = vunpack.c.l.b16 %v54
    %v832 = vunpack.c.l.b16 %v55
    %v833 = vunpack.c.l.b16 %v56
    %v834 = vunpack.c.l.b16 %v57
    %v835 = vunpack.c.l.b16 %v58
    %v836 = vunpack.c.l.b16 %v59
    %v837 = vunpack.c.l.b16 %v60
    %v838 = vunpack.c.l.b16 %v61
    %v839 = vunpack.c.l.b16 %v62
    %v840 = vunpack.c.l.b16 %v63
    %v841 = vunpack.c.l.b16 %v64
    %v842 = vunpack.c.l.b16 %v65
    %v843 = vunpack.c.l.b16 %v66
    %v844 = vunpack.c.l.b16 %v67
    %v845 = vunpack.c.l.b16 %v68
    %v846 = vunpack.c.l.b16 %v69
    %v847 = vunpack.c.l.b16 %v70
    %v848 = vunpack.c.l.b16 %v71
    %v849 = vunpack.c.l.b16 %v72
    %v850 = vunpack.c.l.b16 %v73
    %v851 = vunpack.c.l.b16 %v74
    %v852 = vunpack.c.l.b16 %v75
    %v853 = vunpack.c.l.b16 %v76
    %v854 = vunpack.c.l.b16 %v77
    %v855 = vunpack.c.l.b16 %v78
    %v856 = vunpack.c.l.b16 %v79
    %v857 = vunpack.c.l.b16 %v80
    %v858 = vunpack.c.l.b16 %v81
    %v859 = vunpack.c.l.b16 %v82
    %v860 = vunpack.c.l.b16 %v83
    %v861 = vunpack.c.l.b16 %v84
    %v862 = vunpack.c.l.b16 %v85
    %v863 = vunpack.c.l.b16 %v86
    %v864 = vunpack.c.l.b16 %v87
    %v865 = vunpack.c.l.b16 %v88
    %v866 = vunpack.c.l.b16 %v89
    %v867 = vunpack.c.l.b16 %v90
    %v868 = vunpack.c.l.b16 %v91
    %v869 = vunpack.c.l.b16 %v92
    %v870 = vunpack.c.l.b16 %v93
    %v871 = vunpack.c.l.b16 %v94
    %v872 = vunpack.c.l.b16 %v95
    %v873 = vunpack.c.l.b16 %v96
    %v874 = vunpack.c.l.b16 %v97
    %v875 = vunpack.c.l.b16 %v98
    %v876 = vunpack.c.l.b16 %v99
    %v877 = vunpack.c.l.b16 %v100
    %v878 = vunpack.c.l.b16 %v101
    %v879 = vunpack.c.l.b16 %v102
    %v880 = vunpack.c.l.b16 %v103
    %v881 = vunpack.c.l.b16 %v104
    %v882 = vunpack.c.l.b16 %v105
    %v883 = vunpack.c.l.b16 %v106
    %v884 = vunpack.c.l.b16 %v107
    %v885 = vunpack.c.l.b16 %v108
    %v886 = vunpack.c.l.b16 %v109
    %v887 = vunpack.c.l.b16 %v110
    %v888 = vunpack.c.l.b16 %v111
    %v889 = vunpack.c.l.b16 %v112
    %v890 = vunpack.c.l.b16 %v113
    %v891 = vunpack.c.l.b16 %v114
    %v892 = vunpack.c.l.b16 %v115
    %v893 = vunpack.c.l.b16 %v116
    %v894 = vunpack.c.l.b16 %v117
    %v895 = vunpack.c.l.b16 %v118
    %v896 = vunpack.c.l.b16 %v119
    %v897 = vunpack.c.l.b16 %v120
    %v898 = vunpack.c.l.b16 %v121
    %v899 = vunpack.c.l.b16 %v122
    %v900 = vunpack.c.l.b16 %v123
    %v901 = vunpack.c.l.b16 %v124
    %v902 = vunpack.c.l.b16 %v125
    %v903 = vunpack.c.l.b16 %v126
    %v904 = vunpack.c.l.b16 %v127
    %v905 = vunpack.c.l.b16 %v128
    %v906 = vunpack.c.l.b16 %v129
    %v907 = vunpack.c.l.b16 %v130
    %v908 = vunpack.c.l.b16 %v131
    %v909 = vunpack.c.l.b16 %v132
    %v910 = vunpack.c.l.b16 %v133
    %v911 = vunpack.c.l.b16 %v134
    %v912 = vunpack.c.l.b16 %v135
    %v913 = vunpack.c.l.b16 %v136
    %v914 = vunpack.c.l.b16 %v137
    %v915 = vunpack.c.l.b16 %v138
    %v916 = vunpack.c.l.b16 %v139
    %v917 = vunpack.c.l.b16 %v140
    %v918 = vunpack.c.l.b16 %v141
    %v919 = vunpack.c.l.b16 %v142
    %v920 = vunpack.c.l.b16 %v143
    %v921 = vunpack.c.l.b16 %v144
    %v922 = vunpack.c.l.b16 %v145
    %v923 = vunpack.c.l.b16 %v146
    %v924 = vunpack.c.l.b16 %v147
    %v925 = vunpack.c.l.b16 %v148
    %v926 = vunpack.c.l.b16 %v149
    %v927 = vunpack.c.l.b16 %v150
    %v928 = vunpack.c.l.b16 %v151
    %v929 = vunpack.c.l.b16 %v152
    %v930 = vunpack.c.l.b16 %v153
    %v931 = vunpack.c.l.b16 %v154
    %v932 = vunpack.c.l.b16 %v155
    %v933 = vunpack.c.l.b16 %v156
    %v934 = vunpack.c.l.b16 %v157
    %v935 = vunpack.c.l.b16 %v158
    %v936 = vunpack.c.l.b16 %v159
    %v937 = vunpack.c.l.b16 %v160
    %v938 = vunpack.c.l.b16 %v161
    %v939 = vunpack.c.l.b16 %v162
    %v940 = vunpack.c.l.b16 %v163
    %v941 = vunpack.c.l.b16 %v164
    %v942 = vunpack.c.l.b16 %v165
    %v943 = vunpack.c.l.b16 %v166
    %v944 = vunpack.c.l.b16 %v167
    %v945 = vunpack.c.l.b16 %v168
    %v946 = vunpack.c.l.b16 %v169
    %v947 = vunpack.c.l.b16 %v170
    %v948 = vunpack.c.l.b16 %v171
    %v949 = vunpack.c.l.b16 %v172
    %v950 = vunpack.c.l.b16 %v173
    %v951 = vunpack.c.l.b16 %v174
    %v952 = vunpack.c.l.b16 %v175
    %v953 = vunpack.c.l.b16 %v176
    %v954 = vunpack.c.l.b16 %v177
    %v955 = vunpack.c.l.b16 %v178
    %v956 = vunpack.c.l.b16 %v179
    %v957 = vunpack.c.l.b16 %v180
    %v958 = vunpack.c.l.b16 %v181
    %v959 = vunpack.c.l.b16 %v182
    %v960 = vunpack.c.l.b16 %v183
    %v961 = vunpack.c.l.b16 %v184
    %v962 = vunpack.c.l.b16 %v185
    %v963 = vunpack.c.l.b16 %v186
    %v964 = vunpack.c.l.b16 %v187
    %v965 = vunpack.c.l.b16 %v188
    %v966 = vunpack.c.l.b16 %v189
    %v967 = vunpack.c.l.b16 %v190
    %v968 = vunpack.c.l.b16 %v191
    %v969 = vunpack.c.l.b16 %v192
    %v970 = vunpack.c.l.b16 %v193
    %v971 = vunpack.c.l.b16 %v194
    %v972 = vunpack.c.l.b16 %v195
    %v973 = vunpack.c.l.b16 %v196
    %v974 = vunpack.c.l.b16 %v197
    %v975 = vunpack.c.l.b16 %v198
    %v976 = vunpack.c.l.b16 %v199
    %v977 = vunpack.c.l.b16 %v200
    %v978 = vunpack.c.l.b16 %v201
    %v979 = vunpack.c.l.b16 %v202
    %v980 = vunpack.c.l.b16 %v203
    %v981 = vunpack.c.l.b16 %v204
    %v982 = vunpack.c.l.b16 %v205
    %v983 = vunpack.c.l.b16 %v206
    %v984 = vunpack.c.l.b16 %v207
    %v985 = vunpack.c.l.b16 %v208
    %v986 = vunpack.c.l.b16 %v209
    %v987 = vunpack.c.l.b16 %v210
    %v988 = vunpack.c.l.b16 %v211
    %v989 = vunpack.c.l.b16 %v212
    %v990 = vunpack.c.l.b16 %v213
    %v991 = vunpack.c.l.b16 %v214
    %v992 = vunpack.c.l.b16 %v215
    %v993 = vunpack.c.l.b16 %v216
    %v994 = vunpack.c.l.b16 %v217
    %v995 = vunpack.c.l.b16 %v218
    %v996 = vunpack.c.l.b16 %v219
    %v997 = vunpack.c.l.b16 %v220
    %v998 = vunpack.c.l.b16 %v221
    %v999 = vunpack.c.l.b16 %v222
    %v1000 = vunpack.c.l.b16 %v223
    %v1001 = vunpack.c.l.b16 %v224
    %v1002 = vunpack.c.l.b16 %v225
    %v1003 = vunpack.c.l.b16 %v226
    %v1004 = vunpack.c.l.b16 %v227
    %v1005 = vunpack.c.l.b16 %v228
    %v1006 = vunpack.c.l.b16 %v229
    %v1007 = vunpack.c.l.b16 %v230
    %v1008 = vunpack.c.l.b16 %v231
    %v1009 = vunpack.c.l.b16 %v232
    %v1010 = vunpack.c.l.b16 %v233
    %v1011 = vunpack.c.l.b16 %v234
    %v1012 = vunpack.c.l.b16 %v235
    %v1013 = vunpack.c.l.b16 %v236
    %v1014 = vunpack.c.l.b16 %v237
    %v1015 = vunpack.c.l.b16 %v238
    %v1016 = vunpack.c.l.b16 %v239
    %v1017 = vunpack.c.l.b16 %v240
    %v1018 = vunpack.c.l.b16 %v241
    %v1019 = vunpack.c.l.b16 %v242
    %v1020 = vunpack.c.l.b16 %v243
    %v1021 = vunpack.c.l.b16 %v244
    %v1022 = vunpack.c.l.b16 %v245
    %v1023 = vunpack.c.l.b16 %v246
    %v1024 = vunpack.c.l.b16 %v247
    %v1025 = vunpack.c.l.b16 %v248
    %v1026 = vunpack.c.l.b16 %v249
    %v1027 = vunpack.c.l.b16 %v250
    %v1028 = vunpack.c.l.b16 %v251
    %v1029 = vunpack.c.l.b16 %v252
    %v1030 = vunpack.c.l.b16 %v253
    %v1031 = vunpack.c.l.b16 %v254
    %v1032 = vunpack.c.l.b16 %v255
    %v1033 = vunpack.c.l.b16 %v256
    %v1034 = vunpack.c.l.b16 %v257
    %v1035 = vunpack.c.l.b16 %v258
    %v1036 = vunpack.c.l.b16 %v259
    %v1037 = vunpack.c.l.b16 %v260
    %v1038 = vunpack.c.l.b16 %v261
    %v1039 = vunpack.c.l.b16 %v262
    %v1040 = vunpack.c.l.b16 %v263
    %v1041 = vunpack.c.l.b16 %v264
    %v1042 = vunpack.c.l.b16 %v265
    %v1043 = vunpack.c.l.b16 %v266
    %v1044 = vunpack.c.l.b16 %v267
    %v1045 = vunpack.c.l.b16 %v268
    %v1046 = vunpack.c.l.b16 %v269
    %v1047 = vunpack.c.l.b16 %v270
    %v1048 = vunpack.c.l.b16 %v271
    %v1049 = vunpack.c.l.b16 %v272
    %v1050 = vunpack.c.l.b16 %v273
    %v1051 = vunpack.c.l.b16 %v274
    %v1052 = vunpack.c.l.b16 %v275
    %v1053 = vunpack.c.l.b16 %v276
    %v1054 = vunpack.c.l.b16 %v277
    %v1055 = vunpack.c.l.b16 %v278
    %v1056 = vunpack.c.l.b16 %v279
    %v1057 = vunpack.c.l.b16 %v280
    %v1058 = vunpack.c.l.b16 %v281
    %v1059 = vunpack.c.l.b16 %v282
    %v1060 = vunpack.c.l.b16 %v283
    %v1061 = vunpack.c.l.b16 %v284
    %v1062 = vunpack.c.l.b16 %v285
    %v1063 = vunpack.c.l.b16 %v286
    %v1064 = vunpack.c.l.b16 %v287
    %v1065 = vunpack.c.l.b16 %v288
    %v1066 = vunpack.c.l.b16 %v289
    %v1067 = vunpack.c.l.b16 %v290
    %v1068 = vunpack.c.l.b16 %v291
    %v1069 = vunpack.c.l.b16 %v292
    %v1070 = vunpack.c.l.b16 %v293
    %v1071 = vunpack.c.l.b16 %v294
    %v1072 = vunpack.c.l.b16 %v295
    %v1073 = vunpack.c.l.b16 %v296
    %v1074 = vunpack.c.l.b16 %v297
    %v1075 = vunpack.c.l.b16 %v298
    %v1076 = vunpack.c.l.b16 %v299
    %v1077 = vunpack.c.l.b16 %v300
    %v1078 = vunpack.c.l.b16 %v301
    %v1079 = vunpack.c.l.b16 %v302
    %v1080 = vunpack.c.l.b16 %v303
    %v1081 = vunpack.c.l.b16 %v304
    %v1082 = vunpack.c.l.b16 %v305
    %v1083 = vunpack.c.l.b16 %v306
    %v1084 = vunpack.c.l.b16 %v307
    %v1085 = vunpack.c.l.b16 %v308
    %v1086 = vunpack.c.l.b16 %v309
    %v1087 = vunpack.c.l.b16 %v310
    %v1088 = vunpack.c.l.b16 %v311
    %v1089 = vunpack.c.l.b16 %v312
    %v1090 = vunpack.c.l.b16 %v313
    %v1091 = vunpack.c.l.b16 %v314
    %v1092 = vunpack.c.l.b16 %v315
    %v1093 = vunpack.c.l.b16 %v316
    %v1094 = vunpack.c.l.b16 %v317
    %v1095 = vunpack.c.l.b16 %v318
    %v1096 = vunpack.c.l.b16 %v319
    %v1097 = vunpack.c.l.b16 %v320
    %v1098 = vunpack.c.l.b16 %v321
    %v1099 = vunpack.c.l.b16 %v322
    %v1100 = vunpack.c.l.b16 %v323
    %v1101 = vunpack.c.l.b16 %v324
    %v1102 = vunpack.c.l.b16 %v325
    %v1103 = vunpack.c.l.b16 %v326
    %v1104 = vunpack.c.l.b16 %v327
    %v1105 = vunpack.c.l.b16 %v328
    %v1106 = vunpack.c.l.b16 %v329
    %v1107 = vunpack.c.l.b16 %v330
    %v1108 = vunpack.c.l.b16 %v331
    %v1109 = vunpack.c.l.b16 %v332
    %v1110 = vunpack.c.l.b16 %v333
    %v1111 = vunpack.c.l.b16 %v334
    %v1112 = vunpack.c.l.b16 %v335
    %v1113 = vunpack.c.l.b16 %v336
    %v1114 = vunpack.c.l.b16 %v337
    %v1115 = vpack.c.b16 %v803, %v802
    %v1116 = vpack.c.b16 %v805, %v804
    %v1117 = vpack.c.b16 %v807, %v806
    %v1118 = vpack.c.b16 %v809, %v808
    %v1119 = vpack.c.b16 %v811, %v810
    %v1120 = vpack.c.b16 %v813, %v812
    %v1121 = vpack.c.b16 %v815, %v814
    %v1122 = vpack.c.b16 %v817, %v816
    %v1123 = vpack.c.b16 %v819, %v818
    %v1124 = vpack.c.b16 %v821, %v820
    %v1125 = vpack.c.b16 %v823, %v822
    %v1126 = vpack.c.b16 %v825, %v824
    %v1127 = vpack.c.b16 %v827, %v826
    %v1128 = vpack.c.b16 %v829, %v828
    %v1129 = vpack.c.b16 %v831, %v830
    %v1130 = vpack.c.b16 %v833, %v832
    %v1131 = vpack.c.b16 %v835, %v834
    %v1132 = vpack.c.b16 %v837, %v836
    %v1133 = vpack.c.b16 %v839, %v838
    %v1134 = vpack.c.b16 %v841, %v840
    %v1135 = vpack.c.b16 %v843, %v842
    %v1136 = vpack.c.b16 %v845, %v844
    %v1137 = vpack.c.b16 %v847, %v846
    %v1138 = vpack.c.b16 %v849, %v848
    %v1139 = vpack.c.b16 %v851, %v850
    %v1140 = vpack.c.b16 %v853, %v852
    %v1141 = vpack.c.b16 %v855, %v854
    %v1142 = vpack.c.b16 %v857, %v856
    %v1143 = vpack.c.b16 %v859, %v858
    %v1144 = vpack.c.b16 %v861, %v860
    %v1145 = vpack.c.b16 %v863, %v862
    %v1146 = vpack.c.b16 %v865, %v864
    %v1147 = vpack.c.b16 %v867, %v866
    %v1148 = vpack.c.b16 %v869, %v868
    %v1149 = vpack.c.b16 %v871, %v870
    %v1150 = vpack.c.b16 %v873, %v872
    %v1151 = vpack.c.b16 %v875, %v874
    %v1152 = vpack.c.b16 %v877, %v876
    %v1153 = vpack.c.b16 %v879, %v878
    %v1154 = vpack.c.b16 %v881, %v880
    %v1155 = vpack.c.b16 %v883, %v882
    %v1156 = vpack.c.b16 %v885, %v884
    %v1157 = vpack.c.b16 %v887, %v886
    %v1158 = vpack.c.b16 %v889, %v888
    %v1159 = vpack.c.b16 %v891, %v890
    %v1160 = vpack.c.b16 %v893, %v892
    %v1161 = vpack.c.b16 %v895, %v894
    %v1162 = vpack.c.b16 %v897, %v896
    %v1163 = vpack.c.b16 %v899, %v898
    %v1164 = vpack.c.b16 %v901, %v900
    %v1165 = vpack.c.b16 %v903, %v902
    %v1166 = vpack.c.b16 %v905, %v904
    %v1167 = vpack.c.b16 %v907, %v906
    %v1168 = vpack.c.b16 %v909, %v908
    %v1169 = vpack.c.b16 %v911, %v910
    %v1170 = vpack.c.b16 %v913, %v912
    %v1171 = vpack.c.b16 %v915, %v914
    %v1172 = vpack.c.b16 %v917, %v916
    %v1173 = vpack.c.b16 %v919, %v918
    %v1174 = vpack.c.b16 %v921, %v920
    %v1175 = vpack.c.b16 %v923, %v922
    %v1176 = vpack.c.b16 %v925, %v924
    %v1177 = vpack.c.b16 %v927, %v926
    %v1178 = vpack.c.b16 %v929, %v928
    %v1179 = vpack.c.b16 %v931, %v930
    %v1180 = vpack.c.b16 %v933, %v932
    %v1181 = vpack.c.b16 %v935, %v934
    %v1182 = vpack.c.b16 %v937, %v936
    %v1183 = vpack.c.b16 %v939, %v938
    %v1184 = vpack.c.b16 %v941, %v940
    %v1185 = vpack.c.b16 %v943, %v942
    %v1186 = vpack.c.b16 %v945, %v944
    %v1187 = vpack.c.b16 %v947, %v946
    %v1188 = vpack.c.b16 %v949, %v948
    %v1189 = vpack.c.b16 %v951, %v950
    %v1190 = vpack.c.b16 %v953, %v952
    %v1191 = vpack.c.b16 %v955, %v954
    %v1192 = vpack.c.b16 %v957, %v956
    %v1193 = vpack.c.b16 %v959, %v958
    %v1194 = vpack.c.b16 %v961, %v960
    %v1195 = vpack.c.b16 %v963, %v962
    %v1196 = vpack.c.b16 %v965, %v964
    %v1197 = vpack.c.b16 %v967, %v966
    %v1198 = vpack.c.b16 %v969, %v968
    %v1199 = vpack.c.b16 %v971, %v970
    %v1200 = vpack.c.b16 %v973, %v972
    %v1201 = vpack.c.b16 %v975, %v974
    %v1202 = vpack.c.b16 %v977, %v976
    %v1203 = vpack.c.b16 %v979, %v978
    %v1204 = vpack.c.b16 %v981, %v980
    %v1205 = vpack.c.b16 %v983, %v982
    %v1206 = vpack.c.b16 %v985, %v984
    %v1207 = vpack.c.b16 %v987, %v986
    %v1208 = vpack.c.b16 %v989, %v988
    %v1209 = vpack.c.b16 %v991, %v990
    %v1210 = vpack.c.b16 %v993, %v992
    %v1211 = vpack.c.b16 %v995, %v994
    %v1212 = vpack.c.b16 %v997, %v996
    %v1213 = vpack.c.b16 %v999, %v998
    %v1214 = vpack.c.b16 %v1001, %v1000
    %v1215 = vpack.c.b16 %v1003, %v1002
    %v1216 = vpack.c.b16 %v1005, %v1004
    %v1217 = vpack.c.b16 %v1007, %v1006
    %v1218 = vpack.c.b16 %v1009, %v1008
    %v1219 = vpack.c.b16 %v1011, %v1010
    %v1220 = vpack.c.b16 %v1013, %v1012
    %v1221 = vpack.c.b16 %v1015, %v1014
    %v1222 = vpack.c.b16 %v1017, %v1016
    %v1223 = vpack.c.b16 %v1019, %v1018
    %v1224 = vpack.c.b16 %v1021, %v1020
    %v1225 = vpack.c.b16 %v1023, %v1022
    %v1226 = vpack.c.b16 %v1025, %v1024
    %v1227 = vpack.c.b16 %v1027, %v1026
    %v1228 = vpack.c.b16 %v1029, %v1028
    %v1229 = vpack.c.b16 %v1031, %v1030
    %v1230 = vpack.c.b16 %v1033, %v1032
    %v1231 = vpack.c.b16 %v1035, %v1034
    %v1232 = vpack.c.b16 %v1037, %v1036
    %v1233 = vpack.c.b16 %v1039, %v1038
    %v1234 = vpack.c.b16 %v1041, %v1040
    %v1235 = vpack.c.b16 %v1043, %v1042
    %v1236 = vpack.c.b16 %v1045, %v1044
    %v1237 = vpack.c.b16 %v1047, %v1046
    %v1238 = vpack.c.b16 %v1049, %v1048
    %v1239 = vpack.c.b16 %v1051, %v1050
    %v1240 = vpack.c.b16 %v1053, %v1052
    %v1241 = vpack.c.b16 %v1055, %v1054
    %v1242 = vpack.c.b16 %v1057, %v1056
    %v1243 = vpack.c.b16 %v1059, %v1058
    %v1244 = vpack.c.b16 %v1061, %v1060
    %v1245 = vpack.c.b16 %v1063, %v1062
    %v1246 = vpack.c.b16 %v1065, %v1064
    %v1247 = vpack.c.b16 %v1067, %v1066
    %v1248 = vpack.c.b16 %v1069, %v1068
    %v1249 = vpack.c.b16 %v1071, %v1070
    %v1250 = vpack.c.b16 %v1073, %v1072
    %v1251 = vpack.c.b16 %v1075, %v1074
    %v1252 = vpack.c.b16 %v1077, %v1076
    %v1253 = vpack.c.b16 %v1079, %v1078
    %v1254 = vpack.c.b16 %v1081, %v1080
    %v1255 = vpack.c.b16 %v1083, %v1082
    %v1256 = vpack.c.b16 %v1085, %v1084
    %v1257 = vpack.c.b16 %v1087, %v1086
    %v1258 = vpack.c.b16 %v1089, %v1088
    %v1259 = vpack.c.b16 %v1091, %v1090
    %v1260 = vpack.c.b16 %v1093, %v1092
    %v1261 = vpack.c.b16 %v1095, %v1094
    %v1262 = vpack.c.b16 %v1097, %v1096
    %v1263 = vpack.c.b16 %v1099, %v1098
    %v1264 = vpack.c.b16 %v1101, %v1100
    %v1265 = vpack.c.b16 %v1103, %v1102
    %v1266 = vpack.c.b16 %v1105, %v1104
    %v1267 = vpack.c.b16 %v1107, %v1106
    %v1268 = vpack.c.b16 %v1109, %v1108
    %v1269 = vpack.c.b16 %v1111, %v1110
    %v1270 = vpack.c.b16 %v1113, %v1112
    %v1271 = vpack.c.b16 %v1114, %v1114
    %vm1428 = vcmask 556032
    %v1430 = vsel %vm1428, %v469, 0
    %vm1432 = vcmask 1041408
    %v1434 = vsel %vm1432, %v1271, 0
    %1436 = vmatprep.subr.bf16.mxu0 0
    %1437 = vmatpush1.bf16.msra.mxu0 %v1115
    %1438 = vmatprep.subr.bf16.mxu0 0
    %1439 = vmatpush1.bf16.msra.mxu0 %v1116
    %1440 = vmatprep.subr.bf16.mxu0 0
    %1441 = vmatpush1.bf16.msra.mxu0 %v1117
    %1442 = vmatprep.subr.bf16.mxu0 0
    %1443 = vmatpush1.bf16.msra.mxu0 %v1118
    %1444 = vmatprep.subr.bf16.mxu0 0
    %1445 = vmatpush1.bf16.msra.mxu0 %v1119
    %1446 = vmatprep.subr.bf16.mxu0 0
    %1447 = vmatpush1.bf16.msra.mxu0 %v1120
    %1448 = vmatprep.subr.bf16.mxu0 0
    %1449 = vmatpush1.bf16.msra.mxu0 %v1121
    %1450 = vmatprep.subr.bf16.mxu0 0
    %1451 = vmatpush1.bf16.msra.mxu0 %v1122
    %1452 = vmatprep.subr.bf16.mxu0 0
    %1453 = vmatpush1.bf16.msra.mxu0 %v1123
    %1454 = vmatprep.subr.bf16.mxu0 0
    %1455 = vmatpush1.bf16.msra.mxu0 %v1124
    %1456 = vmatprep.subr.bf16.mxu0 0
    %1457 = vmatpush1.bf16.msra.mxu0 %v1125
    %1458 = vmatprep.subr.bf16.mxu0 0
    %1459 = vmatpush1.bf16.msra.mxu0 %v1126
    %1460 = vmatprep.subr.bf16.mxu0 0
    %1461 = vmatpush1.bf16.msra.mxu0 %v1127
    %1462 = vmatprep.subr.bf16.mxu0 0
    %1463 = vmatpush1.bf16.msra.mxu0 %v1128
    %1464 = vmatprep.subr.bf16.mxu0 0
    %1465 = vmatpush1.bf16.msra.mxu0 %v1129
    %1466 = vmatprep.subr.bf16.mxu0 0
    %1467 = vmatpush1.bf16.msra.mxu0 %v1130
    %1468 = vmatprep.mubr.bf16.mxu0 %v385
    %1469 = vmatmul.mubr.bf16.gmra.mrb[0].mxu0 %v371
    %v1470 = vpop.f32.mrb[0].mxu0
    %v1471 = vadd.f32 %v343, %v1470
    %v1472 = vpop.f32.mrb[0].mxu0
    %v1473 = vpop.f32.mrb[0].mxu0
    %v1474 = vpop.f32.mrb[0].mxu0
    %1475 = vdwg.mxu0
    %1476 = vmatprep.subr.bf16.mxu0 0
    %1477 = vmatpush1.bf16.msra.mxu0 %v1131
    %1478 = vmatprep.subr.bf16.mxu0 0
    %1479 = vmatpush1.bf16.msra.mxu0 %v1132
    %1480 = vmatprep.subr.bf16.mxu0 0
    %1481 = vmatpush1.bf16.msra.mxu0 %v1133
    %1482 = vmatprep.subr.bf16.mxu0 0
    %1483 = vmatpush1.bf16.msra.mxu0 %v1134
    %1484 = vmatprep.subr.bf16.mxu0 0
    %1485 = vmatpush1.bf16.msra.mxu0 %v1135
    %1486 = vmatprep.subr.bf16.mxu0 0
    %1487 = vmatpush1.bf16.msra.mxu0 %v1136
    %1488 = vmatprep.subr.bf16.mxu0 0
    %1489 = vmatpush1.bf16.msra.mxu0 %v1137
    %1490 = vmatprep.subr.bf16.mxu0 0
    %1491 = vmatpush1.bf16.msra.mxu0 %v1138
    %1492 = vmatprep.subr.bf16.mxu0 0
    %1493 = vmatpush1.bf16.msra.mxu0 %v1139
    %1494 = vmatprep.subr.bf16.mxu0 0
    %1495 = vmatpush1.bf16.msra.mxu0 %v1140
    %1496 = vmatprep.subr.bf16.mxu0 0
    %1497 = vmatpush1.bf16.msra.mxu0 %v1141
    %1498 = vmatprep.subr.bf16.mxu0 0
    %1499 = vmatpush1.bf16.msra.mxu0 %v1142
    %1500 = vmatprep.subr.bf16.mxu0 0
    %1501 = vmatpush1.bf16.msra.mxu0 %v1143
    %1502 = vmatprep.subr.bf16.mxu0 0
    %1503 = vmatpush1.bf16.msra.mxu0 %v1144
    %1504 = vmatprep.subr.bf16.mxu0 0
    %1505 = vmatpush1.bf16.msra.mxu0 %v1145
    %1506 = vmatprep.subr.bf16.mxu0 0
    %1507 = vmatpush1.bf16.msra.mxu0 %v1146
    %1508 = vmatprep.mubr.bf16.mxu0 %v395
    %1509 = vmatmul.mubr.bf16.gmra.mrb[0].mxu0 %v393
    %v1510 = vpop.f32.mrb[0].mxu0
    %v1511 = vadd.f32 %v1471, %v1510
    %v1512 = vpop.f32.mrb[0].mxu0
    %v1513 = vpop.f32.mrb[0].mxu0
    %v1514 = vpop.f32.mrb[0].mxu0
    %1515 = vdwg.mxu0
    %1516 = vmatprep.subr.bf16.mxu0 0
    %1517 = vmatpush1.bf16.msra.mxu0 %v1147
    %1518 = vmatprep.subr.bf16.mxu0 0
    %1519 = vmatpush1.bf16.msra.mxu0 %v1148
    %1520 = vmatprep.subr.bf16.mxu0 0
    %1521 = vmatpush1.bf16.msra.mxu0 %v1149
    %1522 = vmatprep.subr.bf16.mxu0 0
    %1523 = vmatpush1.bf16.msra.mxu0 %v1150
    %1524 = vmatprep.subr.bf16.mxu0 0
    %1525 = vmatpush1.bf16.msra.mxu0 %v1151
    %1526 = vmatprep.subr.bf16.mxu0 0
    %1527 = vmatpush1.bf16.msra.mxu0 %v1152
    %1528 = vmatprep.subr.bf16.mxu0 0
    %1529 = vmatpush1.bf16.msra.mxu0 %v1153
    %1530 = vmatprep.subr.bf16.mxu0 0
    %1531 = vmatpush1.bf16.msra.mxu0 %v1154
    %1532 = vmatprep.subr.bf16.mxu0 0
    %1533 = vmatpush1.bf16.msra.mxu0 %v1155
    %1534 = vmatprep.subr.bf16.mxu0 0
    %1535 = vmatpush1.bf16.msra.mxu0 %v1156
    %1536 = vmatprep.subr.bf16.mxu0 0
    %1537 = vmatpush1.bf16.msra.mxu0 %v1157
    %1538 = vmatprep.subr.bf16.mxu0 0
    %1539 = vmatpush1.bf16.msra.mxu0 %v1158
    %1540 = vmatprep.subr.bf16.mxu0 0
    %1541 = vmatpush1.bf16.msra.mxu0 %v1159
    %1542 = vmatprep.subr.bf16.mxu0 0
    %1543 = vmatpush1.bf16.msra.mxu0 %v1160
    %1544 = vmatprep.subr.bf16.mxu0 0
    %1545 = vmatpush1.bf16.msra.mxu0 %v1161
    %1546 = vmatprep.subr.bf16.mxu0 0
    %1547 = vmatpush1.bf16.msra.mxu0 %v1162
    %1548 = vmatprep.mubr.bf16.mxu0 %v392
    %1549 = vmatmul.mubr.bf16.gmra.mrb[0].mxu0 %v378
    %v1550 = vpop.f32.mrb[0].mxu0
    %v1551 = vadd.f32 %v1511, %v1550
    %v1552 = vpop.f32.mrb[0].mxu0
    %v1553 = vpop.f32.mrb[0].mxu0
    %v1554 = vpop.f32.mrb[0].mxu0
    %1555 = vdwg.mxu0
    %1556 = vmatprep.subr.bf16.mxu0 0
    %1557 = vmatpush1.bf16.msra.mxu0 %v1163
    %1558 = vmatprep.subr.bf16.mxu0 0
    %1559 = vmatpush1.bf16.msra.mxu0 %v1164
    %1560 = vmatprep.subr.bf16.mxu0 0
    %1561 = vmatpush1.bf16.msra.mxu0 %v1165
    %1562 = vmatprep.subr.bf16.mxu0 0
    %1563 = vmatpush1.bf16.msra.mxu0 %v1166
    %1564 = vmatprep.subr.bf16.mxu0 0
    %1565 = vmatpush1.bf16.msra.mxu0 %v1167
    %1566 = vmatprep.subr.bf16.mxu0 0
    %1567 = vmatpush1.bf16.msra.mxu0 %v1168
    %1568 = vmatprep.subr.bf16.mxu0 0
    %1569 = vmatpush1.bf16.msra.mxu0 %v1169
    %1570 = vmatprep.subr.bf16.mxu0 0
    %1571 = vmatpush1.bf16.msra.mxu0 %v1170
    %1572 = vmatprep.subr.bf16.mxu0 0
    %1573 = vmatpush1.bf16.msra.mxu0 %v1171
    %1574 = vmatprep.subr.bf16.mxu0 0
    %1575 = vmatpush1.bf16.msra.mxu0 %v1172
    %1576 = vmatprep.subr.bf16.mxu0 0
    %1577 = vmatpush1.bf16.msra.mxu0 %v1173
    %1578 = vmatprep.subr.bf16.mxu0 0
    %1579 = vmatpush1.bf16.msra.mxu0 %v1174
    %1580 = vmatprep.subr.bf16.mxu0 0
    %1581 = vmatpush1.bf16.msra.mxu0 %v1175
    %1582 = vmatprep.subr.bf16.mxu0 0
    %1583 = vmatpush1.bf16.msra.mxu0 %v1176
    %1584 = vmatprep.subr.bf16.mxu0 0
    %1585 = vmatpush1.bf16.msra.mxu0 %v1177
    %1586 = vmatprep.subr.bf16.mxu0 0
    %1587 = vmatpush1.bf16.msra.mxu0 %v1178
    %1588 = vmatprep.mubr.bf16.mxu0 %v396
    %1589 = vmatmul.mubr.bf16.gmra.mrb[0].mxu0 %v394
    %v1590 = vpop.f32.mrb[0].mxu0
    %v1591 = vadd.f32 %v1551, %v1590
    %v1592 = vpop.f32.mrb[0].mxu0
    %v1593 = vpop.f32.mrb[0].mxu0
    %v1594 = vpop.f32.mrb[0].mxu0
    %1595 = vdwg.mxu0
    %1596 = vmatprep.subr.bf16.mxu0 0
    %1597 = vmatpush1.bf16.msra.mxu0 %v1179
    %1598 = vmatprep.subr.bf16.mxu0 0
    %1599 = vmatpush1.bf16.msra.mxu0 %v1180
    %1600 = vmatprep.subr.bf16.mxu0 0
    %1601 = vmatpush1.bf16.msra.mxu0 %v1181
    %1602 = vmatprep.subr.bf16.mxu0 0
    %1603 = vmatpush1.bf16.msra.mxu0 %v1182
    %1604 = vmatprep.subr.bf16.mxu0 0
    %1605 = vmatpush1.bf16.msra.mxu0 %v1183
    %1606 = vmatprep.subr.bf16.mxu0 0
    %1607 = vmatpush1.bf16.msra.mxu0 %v1184
    %1608 = vmatprep.subr.bf16.mxu0 0
    %1609 = vmatpush1.bf16.msra.mxu0 %v1185
    %1610 = vmatprep.subr.bf16.mxu0 0
    %1611 = vmatpush1.bf16.msra.mxu0 %v1186
    %1612 = vmatprep.subr.bf16.mxu0 0
    %1613 = vmatpush1.bf16.msra.mxu0 %v1187
    %1614 = vmatprep.subr.bf16.mxu0 0
    %1615 = vmatpush1.bf16.msra.mxu0 %v1188
    %1616 = vmatprep.subr.bf16.mxu0 0
    %1617 = vmatpush1.bf16.msra.mxu0 %v1189
    %1618 = vmatprep.subr.bf16.mxu0 0
    %1619 = vmatpush1.bf16.msra.mxu0 %v1190
    %1620 = vmatprep.subr.bf16.mxu0 0
    %1621 = vmatpush1.bf16.msra.mxu0 %v1191
    %1622 = vmatprep.subr.bf16.mxu0 0
    %1623 = vmatpush1.bf16.msra.mxu0 %v1192
    %1624 = vmatprep.subr.bf16.mxu0 0
    %1625 = vmatpush1.bf16.msra.mxu0 %v1193
    %1626 = vmatprep.subr.bf16.mxu0 0
    %1627 = vmatpush1.bf16.msra.mxu0 %v1194
    %1628 = vmatprep.mubr.bf16.mxu0 %v434
    %1629 = vmatmul.mubr.bf16.gmra.mrb[0].mxu0 %v420
    %v1630 = vpop.f32.mrb[0].mxu0
    %v1631 = vadd.f32 %v1591, %v1630
    %v1632 = vpop.f32.mrb[0].mxu0
    %v1633 = vpop.f32.mrb[0].mxu0
    %v1634 = vpop.f32.mrb[0].mxu0
    %1635 = vdwg.mxu0
    %1636 = vmatprep.subr.bf16.mxu0 0
    %1637 = vmatpush1.bf16.msra.mxu0 %v1195
    %1638 = vmatprep.subr.bf16.mxu0 0
    %1639 = vmatpush1.bf16.msra.mxu0 %v1196
    %1640 = vmatprep.subr.bf16.mxu0 0
    %1641 = vmatpush1.bf16.msra.mxu0 %v1197
    %1642 = vmatprep.subr.bf16.mxu0 0
    %1643 = vmatpush1.bf16.msra.mxu0 %v1198
    %1644 = vmatprep.subr.bf16.mxu0 0
    %1645 = vmatpush1.bf16.msra.mxu0 %v1199
    %1646 = vmatprep.subr.bf16.mxu0 0
    %1647 = vmatpush1.bf16.msra.mxu0 %v1200
    %1648 = vmatprep.subr.bf16.mxu0 0
    %1649 = vmatpush1.bf16.msra.mxu0 %v1201
    %1650 = vmatprep.subr.bf16.mxu0 0
    %1651 = vmatpush1.bf16.msra.mxu0 %v1202
    %1652 = vmatprep.subr.bf16.mxu0 0
    %1653 = vmatpush1.bf16.msra.mxu0 %v1203
    %1654 = vmatprep.subr.bf16.mxu0 0
    %1655 = vmatpush1.bf16.msra.mxu0 %v1204
    %1656 = vmatprep.subr.bf16.mxu0 0
    %1657 = vmatpush1.bf16.msra.mxu0 %v1205
    %1658 = vmatprep.subr.bf16.mxu0 0
    %1659 = vmatpush1.bf16.msra.mxu0 %v1206
    %1660 = vmatprep.subr.bf16.mxu0 0
    %1661 = vmatpush1.bf16.msra.mxu0 %v1207
    %1662 = vmatprep.subr.bf16.mxu0 0
    %1663 = vmatpush1.bf16.msra.mxu0 %v1208
    %1664 = vmatprep.subr.bf16.mxu0 0
    %1665 = vmatpush1.bf16.msra.mxu0 %v1209
    %1666 = vmatprep.subr.bf16.mxu0 0
    %1667 = vmatpush1.bf16.msra.mxu0 %v1210
    %1668 = vmatprep.mubr.bf16.mxu0 %v444
    %1669 = vmatmul.mubr.bf16.gmra.mrb[0].mxu0 %v442
    %v1670 = vpop.f32.mrb[0].mxu0
    %v1671 = vadd.f32 %v1631, %v1670
    %v1672 = vpop.f32.mrb[0].mxu0
    %v1673 = vpop.f32.mrb[0].mxu0
    %v1674 = vpop.f32.mrb[0].mxu0
    %1675 = vdwg.mxu0
    %1676 = vmatprep.subr.bf16.mxu0 0
    %1677 = vmatpush1.bf16.msra.mxu0 %v1211
    %1678 = vmatprep.subr.bf16.mxu0 0
    %1679 = vmatpush1.bf16.msra.mxu0 %v1212
    %1680 = vmatprep.subr.bf16.mxu0 0
    %1681 = vmatpush1.bf16.msra.mxu0 %v1213
    %1682 = vmatprep.subr.bf16.mxu0 0
    %1683 = vmatpush1.bf16.msra.mxu0 %v1214
    %1684 = vmatprep.subr.bf16.mxu0 0
    %1685 = vmatpush1.bf16.msra.mxu0 %v1215
    %1686 = vmatprep.subr.bf16.mxu0 0
    %1687 = vmatpush1.bf16.msra.mxu0 %v1216
    %1688 = vmatprep.subr.bf16.mxu0 0
    %1689 = vmatpush1.bf16.msra.mxu0 %v1217
    %1690 = vmatprep.subr.bf16.mxu0 0
    %1691 = vmatpush1.bf16.msra.mxu0 %v1218
    %1692 = vmatprep.subr.bf16.mxu0 0
    %1693 = vmatpush1.bf16.msra.mxu0 %v1219
    %1694 = vmatprep.subr.bf16.mxu0 0
    %1695 = vmatpush1.bf16.msra.mxu0 %v1220
    %1696 = vmatprep.subr.bf16.mxu0 0
    %1697 = vmatpush1.bf16.msra.mxu0 %v1221
    %1698 = vmatprep.subr.bf16.mxu0 0
    %1699 = vmatpush1.bf16.msra.mxu0 %v1222
    %1700 = vmatprep.subr.bf16.mxu0 0
    %1701 = vmatpush1.bf16.msra.mxu0 %v1223
    %1702 = vmatprep.subr.bf16.mxu0 0
    %1703 = vmatpush1.bf16.msra.mxu0 %v1224
    %1704 = vmatprep.subr.bf16.mxu0 0
    %1705 = vmatpush1.bf16.msra.mxu0 %v1225
    %1706 = vmatprep.subr.bf16.mxu0 0
    %1707 = vmatpush1.bf16.msra.mxu0 %v1226
    %1708 = vmatprep.mubr.bf16.mxu0 %v441
    %1709 = vmatmul.mubr.bf16.gmra.mrb[0].mxu0 %v427
    %v1710 = vpop.f32.mrb[0].mxu0
    %v1711 = vadd.f32 %v1671, %v1710
    %v1712 = vpop.f32.mrb[0].mxu0
    %v1713 = vpop.f32.mrb[0].mxu0
    %v1714 = vpop.f32.mrb[0].mxu0
    %1715 = vdwg.mxu0
    %1716 = vmatprep.subr.bf16.mxu0 0
    %1717 = vmatpush1.bf16.msra.mxu0 %v1227
    %1718 = vmatprep.subr.bf16.mxu0 0
    %1719 = vmatpush1.bf16.msra.mxu0 %v1228
    %1720 = vmatprep.subr.bf16.mxu0 0
    %1721 = vmatpush1.bf16.msra.mxu0 %v1229
    %1722 = vmatprep.subr.bf16.mxu0 0
    %1723 = vmatpush1.bf16.msra.mxu0 %v1230
    %1724 = vmatprep.subr.bf16.mxu0 0
    %1725 = vmatpush1.bf16.msra.mxu0 %v1231
    %1726 = vmatprep.subr.bf16.mxu0 0
    %1727 = vmatpush1.bf16.msra.mxu0 %v1232
    %1728 = vmatprep.subr.bf16.mxu0 0
    %1729 = vmatpush1.bf16.msra.mxu0 %v1233
    %1730 = vmatprep.subr.bf16.mxu0 0
    %1731 = vmatpush1.bf16.msra.mxu0 %v1234
    %1732 = vmatprep.subr.bf16.mxu0 0
    %1733 = vmatpush1.bf16.msra.mxu0 %v1235
    %1734 = vmatprep.subr.bf16.mxu0 0
    %1735 = vmatpush1.bf16.msra.mxu0 %v1236
    %1736 = vmatprep.subr.bf16.mxu0 0
    %1737 = vmatpush1.bf16.msra.mxu0 %v1237
    %1738 = vmatprep.subr.bf16.mxu0 0
    %1739 = vmatpush1.bf16.msra.mxu0 %v1238
    %1740 = vmatprep.subr.bf16.mxu0 0
    %1741 = vmatpush1.bf16.msra.mxu0 %v1239
    %1742 = vmatprep.subr.bf16.mxu0 0
    %1743 = vmatpush1.bf16.msra.mxu0 %v1240
    %1744 = vmatprep.subr.bf16.mxu0 0
    %1745 = vmatpush1.bf16.msra.mxu0 %v1241
    %1746 = vmatprep.subr.bf16.mxu0 0
    %1747 = vmatpush1.bf16.msra.mxu0 %v1242
    %1748 = vmatprep.mubr.bf16.mxu0 %v445
    %1749 = vmatmul.mubr.bf16.gmra.mrb[0].mxu0 %v443
    %v1750 = vpop.f32.mrb[0].mxu0
    %v1751 = vadd.f32 %v1711, %v1750
    %v1752 = vpop.f32.mrb[0].mxu0
    %v1753 = vpop.f32.mrb[0].mxu0
    %v1754 = vpop.f32.mrb[0].mxu0
    %1755 = vdwg.mxu0
    %1756 = vmatprep.subr.bf16.mxu0 0
    %1757 = vmatpush1.bf16.msra.mxu0 %v1243
    %1758 = vmatprep.subr.bf16.mxu0 0
    %1759 = vmatpush1.bf16.msra.mxu0 %v1244
    %1760 = vmatprep.subr.bf16.mxu0 0
    %1761 = vmatpush1.bf16.msra.mxu0 %v1245
    %1762 = vmatprep.subr.bf16.mxu0 0
    %1763 = vmatpush1.bf16.msra.mxu0 %v1246
    %1764 = vmatprep.subr.bf16.mxu0 0
    %1765 = vmatpush1.bf16.msra.mxu0 %v1247
    %1766 = vmatprep.subr.bf16.mxu0 0
    %1767 = vmatpush1.bf16.msra.mxu0 %v1248
    %1768 = vmatprep.subr.bf16.mxu0 0
    %1769 = vmatpush1.bf16.msra.mxu0 %v1249
    %1770 = vmatprep.subr.bf16.mxu0 0
    %1771 = vmatpush1.bf16.msra.mxu0 %v1250
    %1772 = vmatprep.subr.bf16.mxu0 0
    %1773 = vmatpush1.bf16.msra.mxu0 %v1251
    %1774 = vmatprep.subr.bf16.mxu0 0
    %1775 = vmatpush1.bf16.msra.mxu0 %v1252
    %1776 = vmatprep.subr.bf16.mxu0 0
    %1777 = vmatpush1.bf16.msra.mxu0 %v1253
    %1778 = vmatprep.subr.bf16.mxu0 0
    %1779 = vmatpush1.bf16.msra.mxu0 %v1254
    %1780 = vmatprep.subr.bf16.mxu0 0
    %1781 = vmatpush1.bf16.msra.mxu0 %v1255
    %1782 = vmatprep.subr.bf16.mxu0 0
    %1783 = vmatpush1.bf16.msra.mxu0 %v1256
    %1784 = vmatprep.subr.bf16.mxu0 0
    %1785 = vmatpush1.bf16.msra.mxu0 %v1257
    %1786 = vmatprep.subr.bf16.mxu0 0
    %1787 = vmatpush1.bf16.msra.mxu0 %v1258
    %1788 = vmatprep.mubr.bf16.mxu0 %v467
    %1789 = vmatmul.mubr.bf16.gmra.mrb[0].mxu0 %v460
    %v1790 = vpop.f32.mrb[0].mxu0
    %v1791 = vadd.f32 %v1751, %v1790
    %v1792 = vpop.f32.mrb[0].mxu0
    %v1793 = vpop.f32.mrb[0].mxu0
    %v1794 = vpop.f32.mrb[0].mxu0
    %1795 = vdwg.mxu0
    %1796 = vmatprep.subr.bf16.mxu0 0
    %1797 = vmatpush1.bf16.msra.mxu0 %v1259
    %1798 = vmatprep.subr.bf16.mxu0 0
    %1799 = vmatpush1.bf16.msra.mxu0 %v1260
    %1800 = vmatprep.subr.bf16.mxu0 0
    %1801 = vmatpush1.bf16.msra.mxu0 %v1261
    %1802 = vmatprep.subr.bf16.mxu0 0
    %1803 = vmatpush1.bf16.msra.mxu0 %v1262
    %1804 = vmatprep.subr.bf16.mxu0 0
    %1805 = vmatpush1.bf16.msra.mxu0 %v1263
    %1806 = vmatprep.subr.bf16.mxu0 0
    %1807 = vmatpush1.bf16.msra.mxu0 %v1264
    %1808 = vmatprep.subr.bf16.mxu0 0
    %1809 = vmatpush1.bf16.msra.mxu0 %v1265
    %1810 = vmatprep.subr.bf16.mxu0 0
    %1811 = vmatpush1.bf16.msra.mxu0 %v1266
    %1812 = vmatprep.subr.bf16.mxu0 0
    %1813 = vmatpush1.bf16.msra.mxu0 %v1267
    %1814 = vmatprep.subr.bf16.mxu0 0
    %1815 = vmatpush1.bf16.msra.mxu0 %v1268
    %1816 = vmatprep.subr.bf16.mxu0 0
    %1817 = vmatpush1.bf16.msra.mxu0 %v1269
    %1818 = vmatprep.subr.bf16.mxu0 0
    %1819 = vmatpush1.bf16.msra.mxu0 %v1270
    %1820 = vmatprep.subr.bf16.mxu0 0
    %1821 = vmatpush1.bf16.msra.mxu0 %v1434
    %1822 = vmatprep.subr.bf16.mxu0 0
    %1823 = vmatpush1.bf16.msra.mxu0 0
    %1824 = vmatprep.subr.bf16.mxu0 0
    %1825 = vmatpush1.bf16.msra.mxu0 0
    %1826 = vmatprep.subr.bf16.mxu0 0
    %1827 = vmatpush1.bf16.msra.mxu0 0
    %1828 = vmatprep.mubr.bf16.mxu0 %v1430
    %1829 = vmatmul.mubr.bf16.gmra.mrb[0].mxu0 %v468
    %v1830 = vpop.f32.mrb[0].mxu0
    %v1831 = vadd.f32 %v1791, %v1830
    %v1832 = vpop.f32.mrb[0].mxu0
    %v1833 = vpop.f32.mrb[0].mxu0
    %v1834 = vpop.f32.mrb[0].mxu0
    %1835 = vdwg.mxu0
    %v1836 = vmax.f32 %v1831, 0.0
    %v1837 = vld [vmem:[%s3] sm:$0xff]
    %v1838 = vld [vmem:[%s3 + $0x8] sm:$0xff]
    %v1839 = vld [vmem:[%s3 + $0x10] sm:$0xff]
    %v1840 = vld [vmem:[%s3 + $0x18] sm:$0xff]
    %v1841 = vld [vmem:[%s3 + $0x20] sm:$0xff]
    %v1842 = vld [vmem:[%s3 + $0x28] sm:$0xff]
    %v1843 = vld [vmem:[%s3 + $0x30] sm:$0xff]
    %v1844 = vld [vmem:[%s3 + $0x38] sm:$0xff]
    %v1845 = vld [vmem:[%s3 + $0x40] sm:$0xff]
    %v1846 = vld [vmem:[%s3 + $0x48] sm:$0xff]
    %v1847 = vld [vmem:[%s3 + $0x50] sm:$0xff]
    %v1848 = vld [vmem:[%s3 + $0x58] sm:$0xff]
    %v1849 = vld [vmem:[%s3 + $0x60] sm:$0xff]
    %v1850 = vld [vmem:[%s3 + $0x68] sm:$0xff]
    %v1851 = vld [vmem:[%s3 + $0x70] sm:$0xff]
    %v1852 = vld [vmem:[%s3 + $0x78] sm:$0xff]
    %v1853 = vld [vmem:[%s4] sm:$0x1]
    %v1855 = vlaneseq
    %v1856 = vshrl.u32 %v1855, 7
    %v1857 = vsub.s32 0, %v1856
    %v1858 = vrot.slane %v1853, %v1857
    %1860 = vmatprep.subr.mxu0 0.0
    %1861 = vmatpush1.msra.mxu0 %v1837
    %1862 = vmatprep.subr.mxu0 0.0
    %1863 = vmatpush1.msra.mxu0 %v1838
    %1864 = vmatprep.subr.mxu0 0.0
    %1865 = vmatpush1.msra.mxu0 %v1839
    %1866 = vmatprep.subr.mxu0 0.0
    %1867 = vmatpush1.msra.mxu0 %v1840
    %1868 = vmatprep.subr.mxu0 0.0
    %1869 = vmatpush1.msra.mxu0 %v1841
    %1870 = vmatprep.subr.mxu0 0.0
    %1871 = vmatpush1.msra.mxu0 %v1842
    %1872 = vmatprep.subr.mxu0 0.0
    %1873 = vmatpush1.msra.mxu0 %v1843
    %1874 = vmatprep.subr.mxu0 0.0
    %1875 = vmatpush1.msra.mxu0 %v1844
    %1876 = vmatprep.subr.mxu0 0.0
    %1877 = vmatpush1.msra.mxu0 %v1845
    %1878 = vmatprep.subr.mxu0 0.0
    %1879 = vmatpush1.msra.mxu0 %v1846
    %1880 = vmatprep.subr.mxu0 0.0
    %1881 = vmatpush1.msra.mxu0 %v1847
    %1882 = vmatprep.subr.mxu0 0.0
    %1883 = vmatpush1.msra.mxu0 %v1848
    %1884 = vmatprep.subr.mxu0 0.0
    %1885 = vmatpush1.msra.mxu0 %v1849
    %1886 = vmatprep.subr.mxu0 0.0
    %1887 = vmatpush1.msra.mxu0 %v1850
    %1888 = vmatprep.subr.mxu0 0.0
    %1889 = vmatpush1.msra.mxu0 %v1851
    %1890 = vmatprep.subr.mxu0 0.0
    %1891 = vmatpush1.msra.mxu0 %v1852
    %1892 = vmatprep.subr.mxu0 0.0
    %1893 = vmatpush1.msra.mxu0 0.0
    %1894 = vmatprep.subr.mxu0 0.0
    %1895 = vmatpush1.msra.mxu0 0.0
    %1896 = vmatprep.subr.mxu0 0.0
    %1897 = vmatpush1.msra.mxu0 0.0
    %1898 = vmatprep.subr.mxu0 0.0
    %1899 = vmatpush1.msra.mxu0 0.0
    %1900 = vmatprep.subr.mxu0 0.0
    %1901 = vmatpush1.msra.mxu0 0.0
    %1902 = vmatprep.subr.mxu0 0.0
    %1903 = vmatpush1.msra.mxu0 0.0
    %1904 = vmatprep.subr.mxu0 0.0
    %1905 = vmatpush1.msra.mxu0 0.0
    %1906 = vmatprep.subr.mxu0 0.0
    %1907 = vmatpush1.msra.mxu0 0.0
    %1908 = vmatprep.subr.mxu0 0.0
    %1909 = vmatpush1.msra.mxu0 0.0
    %1910 = vmatprep.subr.mxu0 0.0
    %1911 = vmatpush1.msra.mxu0 0.0
    %1912 = vmatprep.subr.mxu0 0.0
    %1913 = vmatpush1.msra.mxu0 0.0
    %1914 = vmatprep.subr.mxu0 0.0
    %1915 = vmatpush1.msra.mxu0 0.0
    %1916 = vmatprep.subr.mxu0 0.0
    %1917 = vmatpush1.msra.mxu0 0.0
    %1918 = vmatprep.subr.mxu0 0.0
    %1919 = vmatpush1.msra.mxu0 0.0
    %1920 = vmatprep.subr.mxu0 0.0
    %1921 = vmatpush1.msra.mxu0 0.0
    %1922 = vmatprep.subr.mxu0 0.0
    %1923 = vmatpush1.msra.mxu0 0.0
    %1924 = vmatprep.mubr.f32.mxu0 0.0
    %1925 = vmatmul.mubr.f32.gmra.mrb[0].mxu0 %v1836
    %v1926 = vpop.f32.mrb[0].mxu0
    %v1927 = vadd.f32 %v1858, %v1926
    %v1928 = vpop.f32.mrb[0].mxu0
    %1929 = vdwg.mxu0
    %1930 = vst [vmem:[#allocation2] sm:$0x3] %v1927
    // Predicated region
    $region22: #{mlp_forward.1} parent=1 // pred_check
      _
    $region23: #{mlp_forward.1} parent=1 // pred_check_branch
      %1932 = sbr.rel (0) target = $region25
    $region24: #{mlp_forward.1} parent=1 // pred_region
      %s1934 = ssub.s32 32, 32
      %1935 = vsyncadd [#allocation3], %s1934
      %s1937 = sshll.u32 [#allocation2], 4
      %s1938 = int_to_ptr.vmem [resolvable:$true] %s1937
      %1940 = dma.vmem_to_hbm [thread:$0]  %s1938, 32, %s5, [#allocation3]
    $region25: #{mlp_forward.1} parent=1 // pred_fallthru
      _
    // Predicated region
    $region26: #{mlp_forward.1} parent=1 // pred_check
      _
    $region27: #{mlp_forward.1} parent=1 // pred_check_branch
      %1942 = sbr.rel (0) target = $region29
    $region28: #{mlp_forward.1} parent=1 // pred_region
      %1943 = dma.done [#allocation3], 32
    $region29: #{mlp_forward.1} parent=1 // pred_fallthru
      _
    %1944 = vsyncpa [#allocation3], 1

</llo_original>
